<compile_context>
chip_gen: v5e
topology: v5e:2x2
jax: 0.10.0
libtpu: 0.0.40
codegen_flags: <defaults>
</compile_context>

<pallas_src>
import functools
import math

import jax
import jax.numpy as jnp
from jax import lax
from jax.experimental import pallas as pl
from jax.experimental.pallas import tpu as pltpu


def _pair(v):
    if isinstance(v, (tuple, list)):
        assert len(v) == 2
        return int(v[0]), int(v[1])
    return int(v), int(v)


def _conv_bn_relu_kernel(x_ref, w_ref, b_ref, o_ref, *, KH, KW, sh, sw, dh, dw):
    # x_ref: (1, Hp, Wp, C_in)      bf16 padded input image for this batch
    #                               (VMEM-resident across the row-tile grid axis)
    # w_ref: (KH*KW*C_in, C_out)    bf16 BN-folded conv weights, im2col layout (ki,kj,ci)
    # b_ref: (1, C_out)             f32 BN shift (conv has no bias)
    # o_ref: (1, tile_h, W_out, C_out)
    tile_h, W_out, C_out = o_ref.shape[1], o_ref.shape[2], o_ref.shape[3]
    C_in = x_ref.shape[3]
    t = pl.program_id(1)

    n_rows = (tile_h - 1) * sh + dh * (KH - 1) + 1
    row_start = pl.multiple_of(t * (tile_h * sh), tile_h * sh)
    rows = x_ref[0, pl.ds(row_start, n_rows), :, :]            # (n_rows, Wp, C_in) bf16

    # im2col: gather the KH*KW shifted windows once (static unroll), concatenate along
    # the contraction dim, and do a single MXU matmul with K = KH*KW*C_in.
    taps = []
    for ki in range(KH):
        for kj in range(KW):
            patch = rows[ki * dh: ki * dh + (tile_h - 1) * sh + 1: sh,
                         kj * dw: kj * dw + (W_out - 1) * sw + 1: sw, :]
            taps.append(patch.reshape(tile_h * W_out, C_in))   # major-dim-only reshape
    im2col = jnp.concatenate(taps, axis=-1) if len(taps) > 1 else taps[0]

    acc = jnp.dot(im2col, w_ref[...], preferred_element_type=jnp.float32)
    out = jnp.maximum(acc + b_ref[...], 0.0)                   # BN shift + ReLU (f32)

    # TODO(synk): lane-dense store (flatten to (1, tile_h, W_out*C_out)) once the
    # (M, C_out) -> (tile_h, W_out*C_out) relayout is reliably supported by Mosaic.
    o_ref[...] = out.reshape(1, tile_h, W_out, C_out).astype(o_ref.dtype)


class _FusedConvBNReLU:
    """One Conv2d(bias=False) + BatchNorm2d(eval) + ReLU fused into a single Pallas call.

    Consumes and produces NHWC; the ConvBNReLU wrapper handles the NCHW boundary.
    """

    def __init__(self, c_in, c_out, kernel_size, stride, padding, dilation, group, key,
                 out_dtype=jnp.float32):
        # TODO(synk): grouped convolution (per-group matmuls) not implemented.
        assert group == 1
        self.c_in, self.c_out = c_in, c_out
        self.KH, self.KW = _pair(kernel_size)
        self.sh, self.sw = _pair(stride)
        self.ph, self.pw = _pair(padding)
        self.dh, self.dw = _pair(dilation)
        self.group = group
        self.eps = 1e-5
        self.out_dtype = out_dtype

        # Conv2d weight, PyTorch layout (c_out, c_in, kh, kw); bias=False (BIAS=False).
        fan_in = c_in * self.KH * self.KW
        self.w = jax.random.normal(key, (c_out, c_in, self.KH, self.KW),
                                   jnp.float32) / math.sqrt(fan_in)

        # BatchNorm2d(c_out), inference mode, deterministic synthetic parameters.
        self.gamma = 1.0 + 0.1 * jnp.arange(c_out, dtype=jnp.float32)
        self.beta = 0.05 * jnp.arange(c_out, dtype=jnp.float32)
        self.rmean = jnp.zeros((c_out,), jnp.float32)
        self.rvar = jnp.ones((c_out,), jnp.float32)

        # Fold BN scale into the conv weight (exact since the conv has no bias), lay the
        # weight out for the im2col matmul, and cast to bf16 for the MXU.
        scale = self.gamma / jnp.sqrt(self.rvar + self.eps)
        w_folded = self.w * scale[:, None, None, None]
        self.w_mat = jnp.transpose(w_folded, (2, 3, 1, 0)).reshape(
            self.KH * self.KW * c_in, c_out).astype(jnp.bfloat16)
        self.bias = (self.beta - self.rmean * scale).reshape(1, c_out)   # f32 shift

    def _out_hw(self, H, W):
        H_out = (H + 2 * self.ph - self.dh * (self.KH - 1) - 1) // self.sh + 1
        W_out = (W + 2 * self.pw - self.dw * (self.KW - 1) - 1) // self.sw + 1
        return H_out, W_out

    def __call__(self, x_nhwc):
        B, H, W, C = x_nhwc.shape
        assert C == self.c_in
        H_out, W_out = self._out_hw(H, W)

        # bf16 MXU operands; halves pad/DMA bytes.
        # TODO(synk): for large feature maps, replace the HBM jnp.pad + whole-image VMEM
        # block with a halo row-tile (element-offset index_map or manual make_async_copy
        # with a zero-filled halo) so VMEM/HBM traffic is bounded independently of H, W
        # (matters most within v7x's 64 MiB VMEM).
        x_pad = jnp.pad(x_nhwc.astype(jnp.bfloat16),
                        ((0, 0), (self.ph, self.ph), (self.pw, self.pw), (0, 0)))
        Hp, Wp = H + 2 * self.ph, W + 2 * self.pw

        # Row tiling: cap the matmul M dim (~1024 rows) so the accumulator stays near
        # vreg capacity; keep tile_h a divisor of H_out, preferring sublane-aligned
        # (multiple-of-8) or full-height tiles.
        # TODO(synk): cdiv grid + pl.when-masked tail tile for awkward (e.g. prime) H_out.
        cap = max(1, min(H_out, max(1, 1024 // max(1, W_out))))
        divs = [d for d in range(1, cap + 1) if H_out % d == 0]
        aligned = [d for d in divs if d % 8 == 0 or d == H_out]
        tile_h = max(aligned) if aligned else max(divs)
        T = H_out // tile_h

        kern = functools.partial(_conv_bn_relu_kernel, KH=self.KH, KW=self.KW,
                                 sh=self.sh, sw=self.sw, dh=self.dh, dw=self.dw)

        out_nhwc = pl.pallas_call(
            kern,
            out_shape=jax.ShapeDtypeStruct((B, H_out, W_out, self.c_out), self.out_dtype),
            grid_spec=pltpu.PrefetchScalarGridSpec(
                num_scalar_prefetch=0,
                grid=(B, T),
                in_specs=[
                    # whole padded image per batch; index_map constant in t keeps the
                    # block VMEM-resident across that batch's row tiles (no re-fetch).
                    # TODO(synk): pipeline_mode=pl.Buffered(1) on these grid-invariant
                    # blocks to drop the wasted second buffer (v7x VMEM headroom).
                    pl.BlockSpec((1, Hp, Wp, self.c_in), lambda b, t: (b, 0, 0, 0)),
                    pl.BlockSpec((self.KH * self.KW * self.c_in, self.c_out),
                                 lambda b, t: (0, 0)),
                    pl.BlockSpec((1, self.c_out), lambda b, t: (0, 0)),
                ],
                out_specs=pl.BlockSpec((1, tile_h, W_out, self.c_out),
                                       lambda b, t: (b, t, 0, 0)),
            ),
            compiler_params=pltpu.CompilerParams(
                dimension_semantics=("parallel", "parallel"),
                vmem_limit_bytes=32 * 1024 * 1024),
        )(x_pad, self.w_mat, self.bias)

        return out_nhwc


class ConvBNReLU:
    """JAX/Pallas port of the PyTorch ConvBNReLU module (BIAS=False, inference-mode BN).

    Public API is NCHW (like the PyTorch module); internally everything runs NHWC with
    bf16 intermediates between fused units (tuple-kernel branch).
    """

    def __init__(self, c_in, c_out, kernel_size, stride, padding, dilation=1, group=1, *, key):
        if isinstance(kernel_size, int):
            self.units = [_FusedConvBNReLU(c_in, c_out, kernel_size, stride, padding,
                                           dilation, group, key, out_dtype=jnp.float32)]
        else:
            assert isinstance(kernel_size, tuple)
            k1, k2 = kernel_size
            ka, kb = jax.random.split(key)
            self.units = [
                _FusedConvBNReLU(c_in, c_out, (k1, k2), (1, stride), padding[0], 1, 1, ka,
                                 out_dtype=jnp.bfloat16),   # bf16 NHWC intermediate
                _FusedConvBNReLU(c_out, c_out, (k2, k1), (stride, 1), padding[1], 1, 1, kb,
                                 out_dtype=jnp.float32),
            ]

    def __call__(self, x):
        # NCHW <-> NHWC transposes only at the module boundary (not per unit).
        y = jnp.transpose(x, (0, 2, 3, 1))
        for u in self.units:
            y = u(y)
        return jnp.transpose(y, (0, 3, 1, 2)).astype(jnp.float32)


# ----------------------------- pure-JAX reference -----------------------------

def _unit_reference(x, u):
    y = lax.conv_general_dilated(
        x, u.w,
        window_strides=(u.sh, u.sw),
        padding=[(u.ph, u.ph), (u.pw, u.pw)],
        rhs_dilation=(u.dh, u.dw),
        dimension_numbers=('NCHW', 'OIHW', 'NCHW'),
        feature_group_count=u.group)
    scale = (u.gamma / jnp.sqrt(u.rvar + u.eps)).reshape(1, -1, 1, 1)
    shift = (u.beta - u.rmean * (u.gamma / jnp.sqrt(u.rvar + u.eps))).reshape(1, -1, 1, 1)
    return jnp.maximum(y * scale + shift, 0.0)


def _reference(x, mod):
    for u in mod.units:
        x = _unit_reference(x, u)
    return x


def _check(name, out, ref, tol=3e-2):
    # bf16 MXU operands -> compare with a relative-to-max-magnitude tolerance.
    err = float(jnp.max(jnp.abs(out.astype(jnp.float32) - ref)))
    scale = float(jnp.max(jnp.abs(ref))) + 1e-6
    assert err <= tol * scale, f"{name}: rel err {err / scale:.4e} (abs {err:.4e})"


if __name__ == "__main__":
    key = jax.random.PRNGKey(0)
    kx, kp1, kp2 = jax.random.split(key, 3)
    B, C_in, H, W = 2, 4, 16, 16
    C_out = 32
    x = jax.random.normal(kx, (B, C_in, H, W), jnp.float32)

    # int kernel_size branch: Conv(3x3, s=1, p=1) + BN + ReLU
    mod = ConvBNReLU(C_in, C_out, kernel_size=3, stride=1, padding=1, key=kp1)
    out = jax.block_until_ready(jax.jit(mod.__call__)(x))
    ref = _reference(x, mod)
    assert out.shape == (B, C_out, H, W)
    _check("int branch", out, ref)

    # tuple kernel_size branch: Conv(1x3) + BN + ReLU, then Conv(3x1) + BN + ReLU
    mod2 = ConvBNReLU(C_in, C_out, kernel_size=(1, 3), stride=1,
                      padding=((0, 1), (1, 0)), key=kp2)
    out2 = jax.block_until_ready(jax.jit(mod2.__call__)(x))
    ref2 = _reference(x, mod2)
    assert out2.shape == (B, C_out, H, W)
    _check("tuple branch", out2, ref2)

    print("KERNEL_OK")
</pallas_src>

<mosaic_0001>
module attributes {stable_mosaic.version = 11 : i64} {
  func.func @_conv_bn_relu_kernel(%arg0: i32, %arg1: i32, %arg2: memref<1x18x18x4xbf16, #tpu.memory_space<vmem>>, %arg3: memref<36x32xbf16, #tpu.memory_space<vmem>>, %arg4: memref<1x32xf32, #tpu.memory_space<vmem>>, %arg5: memref<1x16x16x32xf32, #tpu.memory_space<vmem>>) attributes {dimension_semantics = [#tpu.dimension_semantics<parallel>, #tpu.dimension_semantics<parallel>], iteration_bounds = array<i64: 2, 1>, scalar_prefetch = 0 : i64, scratch_operands = 0 : i64, tpu.core_type = #tpu.core_type<tc>, window_params = [{transform_indices = @transform_0, window_bounds = array<i64: 1, 18, 18, 4>}, {pipeline_mode = #tpu.pipeline_mode<synchronous>, transform_indices = @transform_1, window_bounds = array<i64: 36, 32>}, {pipeline_mode = #tpu.pipeline_mode<synchronous>, transform_indices = @transform_2, window_bounds = array<i64: 1, 32>}, {transform_indices = @transform_3, window_bounds = array<i64: 1, 16, 16, 32>}]} {
    %c16_i32 = arith.constant 16 : i32
    %0 = arith.muli %arg1, %c16_i32 : i32
    %1 = tpu.assume_multiple %0, 16 : i32
    %c0 = arith.constant 0 : index
    %2 = arith.index_cast %1 : i32 to index
    %c0_0 = arith.constant 0 : index
    %c0_1 = arith.constant 0 : index
    %3 = vector.load %arg2[%c0, %2, %c0_0, %c0_1] : memref<1x18x18x4xbf16, #tpu.memory_space<vmem>>, vector<1x18x18x4xbf16>
    %4 = vector.shape_cast %3 : vector<1x18x18x4xbf16> to vector<18x18x4xbf16>
    %5 = vector.extract_strided_slice %4 {offsets = [0, 0, 0], sizes = [16, 16, 4], strides = [1, 1, 1]} : vector<18x18x4xbf16> to vector<16x16x4xbf16>
    %6 = vector.shape_cast %5 : vector<16x16x4xbf16> to vector<256x4xbf16>
    %7 = vector.extract_strided_slice %4 {offsets = [0, 1, 0], sizes = [16, 16, 4], strides = [1, 1, 1]} : vector<18x18x4xbf16> to vector<16x16x4xbf16>
    %8 = vector.shape_cast %7 : vector<16x16x4xbf16> to vector<256x4xbf16>
    %9 = vector.extract_strided_slice %4 {offsets = [0, 2, 0], sizes = [16, 16, 4], strides = [1, 1, 1]} : vector<18x18x4xbf16> to vector<16x16x4xbf16>
    %10 = vector.shape_cast %9 : vector<16x16x4xbf16> to vector<256x4xbf16>
    %11 = vector.extract_strided_slice %4 {offsets = [1, 0, 0], sizes = [16, 16, 4], strides = [1, 1, 1]} : vector<18x18x4xbf16> to vector<16x16x4xbf16>
    %12 = vector.shape_cast %11 : vector<16x16x4xbf16> to vector<256x4xbf16>
    %13 = vector.extract_strided_slice %4 {offsets = [1, 1, 0], sizes = [16, 16, 4], strides = [1, 1, 1]} : vector<18x18x4xbf16> to vector<16x16x4xbf16>
    %14 = vector.shape_cast %13 : vector<16x16x4xbf16> to vector<256x4xbf16>
    %15 = vector.extract_strided_slice %4 {offsets = [1, 2, 0], sizes = [16, 16, 4], strides = [1, 1, 1]} : vector<18x18x4xbf16> to vector<16x16x4xbf16>
    %16 = vector.shape_cast %15 : vector<16x16x4xbf16> to vector<256x4xbf16>
    %17 = vector.extract_strided_slice %4 {offsets = [2, 0, 0], sizes = [16, 16, 4], strides = [1, 1, 1]} : vector<18x18x4xbf16> to vector<16x16x4xbf16>
    %18 = vector.shape_cast %17 : vector<16x16x4xbf16> to vector<256x4xbf16>
    %19 = vector.extract_strided_slice %4 {offsets = [2, 1, 0], sizes = [16, 16, 4], strides = [1, 1, 1]} : vector<18x18x4xbf16> to vector<16x16x4xbf16>
    %20 = vector.shape_cast %19 : vector<16x16x4xbf16> to vector<256x4xbf16>
    %21 = vector.extract_strided_slice %4 {offsets = [2, 2, 0], sizes = [16, 16, 4], strides = [1, 1, 1]} : vector<18x18x4xbf16> to vector<16x16x4xbf16>
    %22 = vector.shape_cast %21 : vector<16x16x4xbf16> to vector<256x4xbf16>
    %23 = tpu.concatenate %6, %8, %10, %12, %14, %16, %18, %20, %22 in 1 : vector<256x4xbf16>, vector<256x4xbf16>, vector<256x4xbf16>, vector<256x4xbf16>, vector<256x4xbf16>, vector<256x4xbf16>, vector<256x4xbf16>, vector<256x4xbf16>, vector<256x4xbf16> -> vector<256x36xbf16>
    %c0_2 = arith.constant 0 : index
    %c0_3 = arith.constant 0 : index
    %24 = vector.load %arg3[%c0_2, %c0_3] : memref<36x32xbf16, #tpu.memory_space<vmem>>, vector<36x32xbf16>
    %cst = arith.constant dense<0.000000e+00> : vector<256x32xf32>
    %25 = tpu.matmul %23, %24, %cst {dimension_numbers = #tpu.dot_dimension_numbers<[1], [0], [0], [1], [0, 0, 1, 1], [], []>} : vector<256x36xbf16>, vector<36x32xbf16>, vector<256x32xf32> -> vector<256x32xf32>
    %c0_4 = arith.constant 0 : index
    %c0_5 = arith.constant 0 : index
    %26 = vector.load %arg4[%c0_4, %c0_5] : memref<1x32xf32, #tpu.memory_space<vmem>>, vector<1x32xf32>
    %27 = vector.broadcast %26 : vector<1x32xf32> to vector<256x32xf32>
    %28 = arith.addf %25, %27 : vector<256x32xf32>
    %cst_6 = arith.constant 0.000000e+00 : f32
    %29 = vector.broadcast %cst_6 : f32 to vector<256x32xf32>
    %30 = arith.maximumf %28, %29 : vector<256x32xf32>
    %31 = vector.shape_cast %30 : vector<256x32xf32> to vector<1x16x16x32xf32>
    %c0_7 = arith.constant 0 : index
    %c0_8 = arith.constant 0 : index
    %c0_9 = arith.constant 0 : index
    %c0_10 = arith.constant 0 : index
    %32 = vector.load %arg5[%c0_7, %c0_8, %c0_9, %c0_10] : memref<1x16x16x32xf32, #tpu.memory_space<vmem>>, vector<1x16x16x32xf32>
    tpu.vector_store %arg5[%c0_7, %c0_8, %c0_9, %c0_10], %31 {strides = array<i32>} : memref<1x16x16x32xf32, #tpu.memory_space<vmem>>, vector<1x16x16x32xf32>,
    return
  }
  func.func @transform_0(%arg0: i32, %arg1: i32) -> (i32, i32, i32, i32) {
    %c0_i32 = arith.constant 0 : i32
    %c0_i32_0 = arith.constant 0 : i32
    %c0_i32_1 = arith.constant 0 : i32
    %c0_i32_2 = arith.constant 0 : i32
    return %arg0, %c0_i32, %c0_i32_0, %c0_i32_1 : i32, i32, i32, i32
  }
  func.func @transform_1(%arg0: i32, %arg1: i32) -> (i32, i32) {
    %c0_i32 = arith.constant 0 : i32
    %c0_i32_0 = arith.constant 0 : i32
    %c0_i32_1 = arith.constant 0 : i32
    return %c0_i32, %c0_i32_0 : i32, i32
  }
  func.func @transform_2(%arg0: i32, %arg1: i32) -> (i32, i32) {
    %c0_i32 = arith.constant 0 : i32
    %c0_i32_0 = arith.constant 0 : i32
    %c0_i32_1 = arith.constant 0 : i32
    return %c0_i32, %c0_i32_0 : i32, i32
  }
  func.func @transform_3(%arg0: i32, %arg1: i32) -> (i32, i32, i32, i32) {
    %c0_i32 = arith.constant 0 : i32
    %c0_i32_0 = arith.constant 0 : i32
    %c0_i32_1 = arith.constant 0 : i32
    return %arg0, %arg1, %c0_i32, %c0_i32_0 : i32, i32, i32, i32
  }
}

</mosaic_0001>

<llo_original>
// kernel: a_call__.1
$region0: #{a_call__.1}
  #allocation0 [shape = 'u32[]', space=smem, size = 0x4, offset = 0x4, fixed_abs, tag = 'smem constant byte address 0x4 - core index']
  #allocation1 [shape = 'u32[72,128]{1,0:T(1,128)}', space=vmem, size = 0x9000, scoped, tag = 'internal scratch']
  %s0 = inlined_call_operand.vmem [shape: bf16[2,18,18,4], index: 0, kind: input, shape index: {}]
  %s1 = inlined_call_operand.vmem [shape: bf16[36,32], index: 1, kind: input, shape index: {}]
  %s2 = inlined_call_operand.vmem [shape: f32[1,32], index: 2, kind: input, shape index: {}]
  %s3 = inlined_call_operand.hbm [shape: f32[2,16,16,32], index: 3, kind: output, shape index: {}]
  %s4 = sld [smem:[#allocation0]]
  $region45: #{a_call__.1} parent=0
    _
  %s6 = ssub.s32 1, %s4
  %s7 = scalar_select 0, %s6, %s4
  $region1: #{a_call__.1} parent=0
    #allocation2 [shape = 'u8[262144]{0}', space=vmem, size = 0x40000, scoped, tag = 'output window, operand 0']
    #allocation3 [shape = 's32[2]{0}', space=sflag, size = 0x8, scoped, tag = 'scoped memory for a_call__.1']
    %8 = vsyncpa [#allocation3], 0
    %s9 = scalar_lea.sflag [#allocation3], 1
    %10 = vsyncpa %s9, 0
    loop: start=0, step=1, limit=4
    $region2: #{a_call__.1} parent=1 // loop_pre_header
      _
    $region3: #{a_call__.1} parent=1 // loop_header
      %s12 = sphi 0, %s16
      %p13 = scmp.ge.s32.totalorder %s12, 4
      %s19 = sphi 0, %s31
      %s20 = sphi 0, %s27
      %s21 = sphi 0, %s19
      %s22 = sphi 0, %s20
      %s23 = sphi 0, %s21
      %s24 = sphi 0, %s22
      %s34 = sphi 0, %s36
      %s37 = sphi 0, %s34
      %s38 = sphi 0, %s37
      %s54 = sphi 0, %s38
      %s58 = sphi 0, %s58
      %s60 = sphi 0, %s58
      %s61 = sphi 0, %s60
      %s75 = sphi 0, %s61
      %s79 = sphi 0, %s79
      %s81 = sphi 0, %s79
      %s82 = sphi 0, %s81
      %s96 = sphi 0, %s82
      %s104 = sphi 0, %s106
      %s107 = sphi 0, %s104
      %s108 = sphi 0, %s107
      %s124 = sphi 0, %s108
    $region4: #{a_call__.1} parent=1 // loop_header_branch
      %15 = sbr.rel (%p13) target = $region8
    $region5: #{a_call__.1} parent=1 // loop_body
      %s17 = ssub.s32 %s12, 1
      %s18 = ssub.s32 %s12, 2
      %s25 = sadd.s32 1, %s20
      %p26 = scmp.ge.s32.totalorder %s25, 1
      %s27 = scalar_select %p26, 0, %s25
      %s28 = sadd.s32 1, %s19
      %s29 = scalar_select %p26, %s28, %s19
      %p30 = scmp.ge.s32.totalorder %s29, 2
      %s31 = scalar_select %p30, 0, %s29
      %s32 = ssub.s32 %s19, %s31
      %p33 = scmp.eq.s32.totalorder %s32, 0
      %s35 = sadd.s32 %s34, 1
      %s36 = scalar_select %p33, %s34, %s35
      %p39 = pneg %p33
      %p40 = scmp.eq.s32.totalorder %s12, 1
      %p41 = por %p39, %p40
      %p42 = scmp.ne.s32.totalorder %s34, %s37
      %p43 = scmp.eq.s32.totalorder %s12, 0
      %p44 = por %p42, %p43
      %p45 = scmp.ne.s32.totalorder %s34, %s37
      %p46 = scmp.eq.s32.totalorder %s17, 1
      %p47 = por %p45, %p46
      %p48 = scmp.ne.s32.totalorder %s37, %s38
      %p49 = scmp.eq.s32.totalorder %s17, 0
      %p50 = por %p48, %p49
      %p51 = scmp.ne.s32.totalorder %s37, %s38
      %p52 = scmp.eq.s32.totalorder %s18, 1
      %p53 = por %p51, %p52
      %p55 = scmp.ne.s32.totalorder %s38, %s54
      %p56 = scmp.eq.s32.totalorder %s18, 0
      %p57 = por %p55, %p56
      %s59 = sadd.s32 %s58, 1
      %p62 = scmp.eq.s32.totalorder %s12, 1
      %p63 = scmp.ne.s32.totalorder %s58, %s60
      %p64 = scmp.eq.s32.totalorder %s12, 0
      %p65 = por %p63, %p64
      %p66 = scmp.ne.s32.totalorder %s58, %s60
      %p67 = scmp.eq.s32.totalorder %s17, 1
      %p68 = por %p66, %p67
      %p69 = scmp.ne.s32.totalorder %s60, %s61
      %p70 = scmp.eq.s32.totalorder %s17, 0
      %p71 = por %p69, %p70
      %p72 = scmp.ne.s32.totalorder %s60, %s61
      %p73 = scmp.eq.s32.totalorder %s18, 1
      %p74 = por %p72, %p73
      %p76 = scmp.ne.s32.totalorder %s61, %s75
      %p77 = scmp.eq.s32.totalorder %s18, 0
      %p78 = por %p76, %p77
      %s80 = sadd.s32 %s79, 1
      %p83 = scmp.eq.s32.totalorder %s12, 1
      %p84 = scmp.ne.s32.totalorder %s79, %s81
      %p85 = scmp.eq.s32.totalorder %s12, 0
      %p86 = por %p84, %p85
      %p87 = scmp.ne.s32.totalorder %s79, %s81
      %p88 = scmp.eq.s32.totalorder %s17, 1
      %p89 = por %p87, %p88
      %p90 = scmp.ne.s32.totalorder %s81, %s82
      %p91 = scmp.eq.s32.totalorder %s17, 0
      %p92 = por %p90, %p91
      %p93 = scmp.ne.s32.totalorder %s81, %s82
      %p94 = scmp.eq.s32.totalorder %s18, 1
      %p95 = por %p93, %p94
      %p97 = scmp.ne.s32.totalorder %s82, %s96
      %p98 = scmp.eq.s32.totalorder %s18, 0
      %p99 = por %p97, %p98
      %s100 = ssub.s32 %s19, %s31
      %s101 = ssub.s32 %s20, %s27
      %s102 = sor.u32 %s100, %s101
      %p103 = scmp.eq.s32.totalorder %s102, 0
      %s105 = sadd.s32 %s104, 1
      %s106 = scalar_select %p103, %s104, %s105
      %p109 = pneg %p103
      %p110 = scmp.eq.s32.totalorder %s12, 1
      %p111 = por %p109, %p110
      %p112 = scmp.ne.s32.totalorder %s104, %s107
      %p113 = scmp.eq.s32.totalorder %s12, 0
      %p114 = por %p112, %p113
      %p115 = scmp.ne.s32.totalorder %s104, %s107
      %p116 = scmp.eq.s32.totalorder %s17, 1
      %p117 = por %p115, %p116
      %p118 = scmp.ne.s32.totalorder %s107, %s108
      %p119 = scmp.eq.s32.totalorder %s17, 0
      %p120 = por %p118, %p119
      %p121 = scmp.ne.s32.totalorder %s107, %s108
      %p122 = scmp.eq.s32.totalorder %s18, 1
      %p123 = por %p121, %p122
      %p125 = scmp.ne.s32.totalorder %s108, %s124
      %p126 = scmp.eq.s32.totalorder %s18, 0
      %p127 = por %p125, %p126
      %p128 = scmp.le.s32.totalorder 1, %s12
      %p129 = scmp.lt.s32.totalorder %s12, 3
      %p130 = pnand %p128, %p129
      %p131 = pneg %p130
      // Predicated region
      $region9: #{a_call__.1} parent=5 // pred_check
        _
      $region10: #{a_call__.1} parent=5 // pred_check_branch
        %133 = sbr.rel (%p130) target = $region12
      $region11: #{a_call__.1} parent=5 // pred_region
        %s134 = ssub.s32 %s12, 1
        // Predicated region
        $region13: #{a_call__.1} parent=11 // pred_check
          %p135 = pneg %p71
        $region14: #{a_call__.1} parent=11 // pred_check_branch
          %137 = sbr.rel (%p135) target = $region16
        $region15: #{a_call__.1} parent=11 // pred_region
          _
        $region16: #{a_call__.1} parent=11 // pred_fallthru
          _
        // Predicated region
        $region17: #{a_call__.1} parent=11 // pred_check
          %p138 = pneg %p92
        $region18: #{a_call__.1} parent=11 // pred_check_branch
          %140 = sbr.rel (%p138) target = $region20
        $region19: #{a_call__.1} parent=11 // pred_region
          _
        $region20: #{a_call__.1} parent=11 // pred_fallthru
          _
      $region12: #{a_call__.1} parent=5 // pred_fallthru
        _
      %p141 = scmp.lt.s32.totalorder %s12, 2
      // Predicated region
      $region21: #{a_call__.1} parent=5 // pred_check
        %p142 = pneg %p141
      $region22: #{a_call__.1} parent=5 // pred_check_branch
        %144 = sbr.rel (%p142) target = $region24
      $region23: #{a_call__.1} parent=5 // pred_region
        // Predicated region
        $region25: #{a_call__.1} parent=23 // pred_check
          %p145 = pneg %p44
        $region26: #{a_call__.1} parent=23 // pred_check_branch
          %147 = sbr.rel (%p145) target = $region28
        $region27: #{a_call__.1} parent=23 // pred_region
          %p148 = scmp.lt.s32.totalorder %s19, 1
          %s149 = scalar_select %p148, %s19, 1
          %s150 = smul.addr %s149, 54
          %s151 = smul.addr %s150, 4
          %s152 = scalar_lea.vmem %s0, %s151
        $region28: #{a_call__.1} parent=23 // pred_fallthru
          _
      $region24: #{a_call__.1} parent=5 // pred_fallthru
        _
      %p153 = scmp.le.s32.totalorder 1, %s12
      %p154 = scmp.lt.s32.totalorder %s12, 3
      %p155 = pnand %p153, %p154
      %p156 = pneg %p155
      // Predicated region
      $region29: #{a_call__.1} parent=5 // pred_check
        _
      $region30: #{a_call__.1} parent=5 // pred_check_branch
        %158 = sbr.rel (%p155) target = $region32
      $region31: #{a_call__.1} parent=5 // pred_region
        %s159 = ssub.s32 %s12, 1
        %p160 = scmp.lt.s32.totalorder %s21, 1
        %s161 = scalar_select %p160, %s21, 1
        %s162 = smul.addr %s161, 54
        %s163 = smul.addr %s162, 4
        %s164 = scalar_lea.vmem %s0, %s163
        %p165 = pneg %p50
        %p166 = pneg %p47
        %p167 = pneg %p71
        %p168 = pneg %p68
        %p169 = pneg %p92
        %p170 = pneg %p89
        %p171 = pneg %p120
        %p172 = pneg %p117
        %s173 = sand.u32 %s107, 1
        %s174 = scalar_lea.sflag [#allocation3], %s173
        %s175 = sand.u32 %s107, 1
        %s176 = smul.addr %s175, 256
        %s177 = scalar_lea.vmem [#allocation2], %s176
        %p178 = scmp.lt.s32.totalorder %s21, 1
        %s179 = scalar_select %p178, %s21, 1
        %s180 = smul.addr %s179, 54
        %s181 = smul.addr %s180, 4
        %s182 = scalar_lea.vmem %s0, %s181
        %s183 = smul.u32 16, %s22
        %s185 = smul.u32 %s22, 16
        %s186 = smul.u32 %s185, 3
        %s187 = smul.addr %s186, 4
        %s188 = scalar_lea.vmem %s182, %s187
        %v189 = vld [vmem:[%s188] sm:$0xf]
        %v190 = vld [vmem:[%s188 + $0x4] sm:$0xf]
        %v191 = vld [vmem:[%s188 + $0x8] sm:$0x1]
        %v192 = vld [vmem:[%s188 + $0xc] sm:$0xf]
        %v193 = vld [vmem:[%s188 + $0x10] sm:$0xf]
        %v194 = vld [vmem:[%s188 + $0x14] sm:$0x1]
        %v195 = vld [vmem:[%s188 + $0x18] sm:$0xf]
        %v196 = vld [vmem:[%s188 + $0x1c] sm:$0xf]
        %v197 = vld [vmem:[%s188 + $0x20] sm:$0x1]
        %v198 = vld [vmem:[%s188 + $0x24] sm:$0xf]
        %v199 = vld [vmem:[%s188 + $0x28] sm:$0xf]
        %v200 = vld [vmem:[%s188 + $0x2c] sm:$0x1]
        %v201 = vld [vmem:[%s188 + $0x30] sm:$0xf]
        %v202 = vld [vmem:[%s188 + $0x34] sm:$0xf]
        %v203 = vld [vmem:[%s188 + $0x38] sm:$0x1]
        %v204 = vld [vmem:[%s188 + $0x3c] sm:$0xf]
        %v205 = vld [vmem:[%s188 + $0x40] sm:$0xf]
        %v206 = vld [vmem:[%s188 + $0x44] sm:$0x1]
        %v207 = vld [vmem:[%s188 + $0x48] sm:$0xf]
        %v208 = vld [vmem:[%s188 + $0x4c] sm:$0xf]
        %v209 = vld [vmem:[%s188 + $0x50] sm:$0x1]
        %v210 = vld [vmem:[%s188 + $0x54] sm:$0xf]
        %v211 = vld [vmem:[%s188 + $0x58] sm:$0xf]
        %v212 = vld [vmem:[%s188 + $0x5c] sm:$0x1]
        %v213 = vld [vmem:[%s188 + $0x60] sm:$0xf]
        %v214 = vld [vmem:[%s188 + $0x64] sm:$0xf]
        %v215 = vld [vmem:[%s188 + $0x68] sm:$0x1]
        %v216 = vld [vmem:[%s188 + $0x6c] sm:$0xf]
        %v217 = vld [vmem:[%s188 + $0x70] sm:$0xf]
        %v218 = vld [vmem:[%s188 + $0x74] sm:$0x1]
        %v219 = vld [vmem:[%s188 + $0x78] sm:$0xf]
        %v220 = vld [vmem:[%s188 + $0x7c] sm:$0xf]
        %v221 = vld [vmem:[%s188 + $0x80] sm:$0x1]
        %v222 = vld [vmem:[%s188 + $0x84] sm:$0xf]
        %v223 = vld [vmem:[%s188 + $0x88] sm:$0xf]
        %v224 = vld [vmem:[%s188 + $0x8c] sm:$0x1]
        %v225 = vld [vmem:[%s188 + $0x90] sm:$0xf]
        %v226 = vld [vmem:[%s188 + $0x94] sm:$0xf]
        %v227 = vld [vmem:[%s188 + $0x98] sm:$0x1]
        %v228 = vld [vmem:[%s188 + $0x9c] sm:$0xf]
        %v229 = vld [vmem:[%s188 + $0xa0] sm:$0xf]
        %v230 = vld [vmem:[%s188 + $0xa4] sm:$0x1]
        %v231 = vld [vmem:[%s188 + $0xa8] sm:$0xf]
        %v232 = vld [vmem:[%s188 + $0xac] sm:$0xf]
        %v233 = vld [vmem:[%s188 + $0xb0] sm:$0x1]
        %v234 = vld [vmem:[%s188 + $0xb4] sm:$0xf]
        %v235 = vld [vmem:[%s188 + $0xb8] sm:$0xf]
        %v236 = vld [vmem:[%s188 + $0xbc] sm:$0x1]
        %v237 = vld [vmem:[%s188 + $0xc0] sm:$0xf]
        %v238 = vld [vmem:[%s188 + $0xc4] sm:$0xf]
        %v239 = vld [vmem:[%s188 + $0xc8] sm:$0x1]
        %v240 = vld [vmem:[%s188 + $0xcc] sm:$0xf]
        %v241 = vld [vmem:[%s188 + $0xd0] sm:$0xf]
        %v242 = vld [vmem:[%s188 + $0xd4] sm:$0x1]
        %vm243 = vsmask.f32 3328
        %vm244 = vsmask.f32 7440
        %vm245 = vmor %vm243, %vm244
        %v247 = vshrl.u32 %v189, 16
        %v249 = vrot.slane %v247, 4
        %v250 = vshll.u32 %v189, 16
        %v252 = vrot.slane %v250, 5
        %v253 = vor.u32 %v249, %v252
        %v254 = vrot.slane %v253, 4
        %v256 = vshll.u32 %v190, 16
        %v258 = vrot.slane %v256, 5
        %v259 = vsel %vm245, %v254, %v258
        %v260 = vshrl.u32 %v190, 16
        %v262 = vrot.slane %v260, 4
        %v263 = vor.u32 %v262, %v258
        %v264 = vrot.slane %v263, 4
        %v266 = vshll.u32 %v191, 16
        %v268 = vrot.slane %v266, 5
        %v269 = vsel %vm245, %v264, %v268
        %v271 = vshrl.u32 %v192, 16
        %v273 = vrot.slane %v271, 4
        %v274 = vshll.u32 %v192, 16
        %v276 = vrot.slane %v274, 5
        %v277 = vor.u32 %v273, %v276
        %v278 = vrot.slane %v277, 4
        %v280 = vshll.u32 %v193, 16
        %v282 = vrot.slane %v280, 5
        %v283 = vsel %vm245, %v278, %v282
        %v284 = vshrl.u32 %v193, 16
        %v286 = vrot.slane %v284, 4
        %v287 = vor.u32 %v286, %v282
        %v288 = vrot.slane %v287, 4
        %v290 = vshll.u32 %v194, 16
        %v292 = vrot.slane %v290, 5
        %v293 = vsel %vm245, %v288, %v292
        %v295 = vshrl.u32 %v195, 16
        %v297 = vrot.slane %v295, 4
        %v298 = vshll.u32 %v195, 16
        %v300 = vrot.slane %v298, 5
        %v301 = vor.u32 %v297, %v300
        %v302 = vrot.slane %v301, 4
        %v304 = vshll.u32 %v196, 16
        %v306 = vrot.slane %v304, 5
        %v307 = vsel %vm245, %v302, %v306
        %v308 = vshrl.u32 %v196, 16
        %v310 = vrot.slane %v308, 4
        %v311 = vor.u32 %v310, %v306
        %v312 = vrot.slane %v311, 4
        %v314 = vshll.u32 %v197, 16
        %v316 = vrot.slane %v314, 5
        %v317 = vsel %vm245, %v312, %v316
        %v319 = vshrl.u32 %v198, 16
        %v321 = vrot.slane %v319, 4
        %v322 = vshll.u32 %v198, 16
        %v324 = vrot.slane %v322, 5
        %v325 = vor.u32 %v321, %v324
        %v326 = vrot.slane %v325, 4
        %v328 = vshll.u32 %v199, 16
        %v330 = vrot.slane %v328, 5
        %v331 = vsel %vm245, %v326, %v330
        %v332 = vshrl.u32 %v199, 16
        %v334 = vrot.slane %v332, 4
        %v335 = vor.u32 %v334, %v330
        %v336 = vrot.slane %v335, 4
        %v338 = vshll.u32 %v200, 16
        %v340 = vrot.slane %v338, 5
        %v341 = vsel %vm245, %v336, %v340
        %v343 = vshrl.u32 %v201, 16
        %v345 = vrot.slane %v343, 4
        %v346 = vshll.u32 %v201, 16
        %v348 = vrot.slane %v346, 5
        %v349 = vor.u32 %v345, %v348
        %v350 = vrot.slane %v349, 4
        %v352 = vshll.u32 %v202, 16
        %v354 = vrot.slane %v352, 5
        %v355 = vsel %vm245, %v350, %v354
        %v356 = vshrl.u32 %v202, 16
        %v358 = vrot.slane %v356, 4
        %v359 = vor.u32 %v358, %v354
        %v360 = vrot.slane %v359, 4
        %v362 = vshll.u32 %v203, 16
        %v364 = vrot.slane %v362, 5
        %v365 = vsel %vm245, %v360, %v364
        %v367 = vshrl.u32 %v204, 16
        %v369 = vrot.slane %v367, 4
        %v370 = vshll.u32 %v204, 16
        %v372 = vrot.slane %v370, 5
        %v373 = vor.u32 %v369, %v372
        %v374 = vrot.slane %v373, 4
        %v376 = vshll.u32 %v205, 16
        %v378 = vrot.slane %v376, 5
        %v379 = vsel %vm245, %v374, %v378
        %v380 = vshrl.u32 %v205, 16
        %v382 = vrot.slane %v380, 4
        %v383 = vor.u32 %v382, %v378
        %v384 = vrot.slane %v383, 4
        %v386 = vshll.u32 %v206, 16
        %v388 = vrot.slane %v386, 5
        %v389 = vsel %vm245, %v384, %v388
        %v391 = vshrl.u32 %v207, 16
        %v393 = vrot.slane %v391, 4
        %v394 = vshll.u32 %v207, 16
        %v396 = vrot.slane %v394, 5
        %v397 = vor.u32 %v393, %v396
        %v398 = vrot.slane %v397, 4
        %v400 = vshll.u32 %v208, 16
        %v402 = vrot.slane %v400, 5
        %v403 = vsel %vm245, %v398, %v402
        %v404 = vshrl.u32 %v208, 16
        %v406 = vrot.slane %v404, 4
        %v407 = vor.u32 %v406, %v402
        %v408 = vrot.slane %v407, 4
        %v410 = vshll.u32 %v209, 16
        %v412 = vrot.slane %v410, 5
        %v413 = vsel %vm245, %v408, %v412
        %v415 = vshrl.u32 %v210, 16
        %v417 = vrot.slane %v415, 4
        %v418 = vshll.u32 %v210, 16
        %v420 = vrot.slane %v418, 5
        %v421 = vor.u32 %v417, %v420
        %v422 = vrot.slane %v421, 4
        %v424 = vshll.u32 %v211, 16
        %v426 = vrot.slane %v424, 5
        %v427 = vsel %vm245, %v422, %v426
        %v428 = vshrl.u32 %v211, 16
        %v430 = vrot.slane %v428, 4
        %v431 = vor.u32 %v430, %v426
        %v432 = vrot.slane %v431, 4
        %v434 = vshll.u32 %v212, 16
        %v436 = vrot.slane %v434, 5
        %v437 = vsel %vm245, %v432, %v436
        %v439 = vshrl.u32 %v213, 16
        %v441 = vrot.slane %v439, 4
        %v442 = vshll.u32 %v213, 16
        %v444 = vrot.slane %v442, 5
        %v445 = vor.u32 %v441, %v444
        %v446 = vrot.slane %v445, 4
        %v448 = vshll.u32 %v214, 16
        %v450 = vrot.slane %v448, 5
        %v451 = vsel %vm245, %v446, %v450
        %v452 = vshrl.u32 %v214, 16
        %v454 = vrot.slane %v452, 4
        %v455 = vor.u32 %v454, %v450
        %v456 = vrot.slane %v455, 4
        %v458 = vshll.u32 %v215, 16
        %v460 = vrot.slane %v458, 5
        %v461 = vsel %vm245, %v456, %v460
        %v463 = vshrl.u32 %v216, 16
        %v465 = vrot.slane %v463, 4
        %v466 = vshll.u32 %v216, 16
        %v468 = vrot.slane %v466, 5
        %v469 = vor.u32 %v465, %v468
        %v470 = vrot.slane %v469, 4
        %v472 = vshll.u32 %v217, 16
        %v474 = vrot.slane %v472, 5
        %v475 = vsel %vm245, %v470, %v474
        %v476 = vshrl.u32 %v217, 16
        %v478 = vrot.slane %v476, 4
        %v479 = vor.u32 %v478, %v474
        %v480 = vrot.slane %v479, 4
        %v482 = vshll.u32 %v218, 16
        %v484 = vrot.slane %v482, 5
        %v485 = vsel %vm245, %v480, %v484
        %v487 = vshrl.u32 %v219, 16
        %v489 = vrot.slane %v487, 4
        %v490 = vshll.u32 %v219, 16
        %v492 = vrot.slane %v490, 5
        %v493 = vor.u32 %v489, %v492
        %v494 = vrot.slane %v493, 4
        %v496 = vshll.u32 %v220, 16
        %v498 = vrot.slane %v496, 5
        %v499 = vsel %vm245, %v494, %v498
        %v500 = vshrl.u32 %v220, 16
        %v502 = vrot.slane %v500, 4
        %v503 = vor.u32 %v502, %v498
        %v504 = vrot.slane %v503, 4
        %v506 = vshll.u32 %v221, 16
        %v508 = vrot.slane %v506, 5
        %v509 = vsel %vm245, %v504, %v508
        %v511 = vshrl.u32 %v222, 16
        %v513 = vrot.slane %v511, 4
        %v514 = vshll.u32 %v222, 16
        %v516 = vrot.slane %v514, 5
        %v517 = vor.u32 %v513, %v516
        %v518 = vrot.slane %v517, 4
        %v520 = vshll.u32 %v223, 16
        %v522 = vrot.slane %v520, 5
        %v523 = vsel %vm245, %v518, %v522
        %v524 = vshrl.u32 %v223, 16
        %v526 = vrot.slane %v524, 4
        %v527 = vor.u32 %v526, %v522
        %v528 = vrot.slane %v527, 4
        %v530 = vshll.u32 %v224, 16
        %v532 = vrot.slane %v530, 5
        %v533 = vsel %vm245, %v528, %v532
        %v535 = vshrl.u32 %v225, 16
        %v537 = vrot.slane %v535, 4
        %v538 = vshll.u32 %v225, 16
        %v540 = vrot.slane %v538, 5
        %v541 = vor.u32 %v537, %v540
        %v542 = vrot.slane %v541, 4
        %v544 = vshll.u32 %v226, 16
        %v546 = vrot.slane %v544, 5
        %v547 = vsel %vm245, %v542, %v546
        %v548 = vshrl.u32 %v226, 16
        %v550 = vrot.slane %v548, 4
        %v551 = vor.u32 %v550, %v546
        %v552 = vrot.slane %v551, 4
        %v554 = vshll.u32 %v227, 16
        %v556 = vrot.slane %v554, 5
        %v557 = vsel %vm245, %v552, %v556
        %v559 = vshrl.u32 %v228, 16
        %v561 = vrot.slane %v559, 4
        %v562 = vshll.u32 %v228, 16
        %v564 = vrot.slane %v562, 5
        %v565 = vor.u32 %v561, %v564
        %v566 = vrot.slane %v565, 4
        %v568 = vshll.u32 %v229, 16
        %v570 = vrot.slane %v568, 5
        %v571 = vsel %vm245, %v566, %v570
        %v572 = vshrl.u32 %v229, 16
        %v574 = vrot.slane %v572, 4
        %v575 = vor.u32 %v574, %v570
        %v576 = vrot.slane %v575, 4
        %v578 = vshll.u32 %v230, 16
        %v580 = vrot.slane %v578, 5
        %v581 = vsel %vm245, %v576, %v580
        %v583 = vshrl.u32 %v231, 16
        %v585 = vrot.slane %v583, 4
        %v586 = vshll.u32 %v231, 16
        %v588 = vrot.slane %v586, 5
        %v589 = vor.u32 %v585, %v588
        %v590 = vrot.slane %v589, 4
        %v592 = vshll.u32 %v232, 16
        %v594 = vrot.slane %v592, 5
        %v595 = vsel %vm245, %v590, %v594
        %v596 = vshrl.u32 %v232, 16
        %v598 = vrot.slane %v596, 4
        %v599 = vor.u32 %v598, %v594
        %v600 = vrot.slane %v599, 4
        %v602 = vshll.u32 %v233, 16
        %v604 = vrot.slane %v602, 5
        %v605 = vsel %vm245, %v600, %v604
        %v607 = vshrl.u32 %v234, 16
        %v609 = vrot.slane %v607, 4
        %v610 = vshll.u32 %v234, 16
        %v612 = vrot.slane %v610, 5
        %v613 = vor.u32 %v609, %v612
        %v614 = vrot.slane %v613, 4
        %v616 = vshll.u32 %v235, 16
        %v618 = vrot.slane %v616, 5
        %v619 = vsel %vm245, %v614, %v618
        %v620 = vshrl.u32 %v235, 16
        %v622 = vrot.slane %v620, 4
        %v623 = vor.u32 %v622, %v618
        %v624 = vrot.slane %v623, 4
        %v626 = vshll.u32 %v236, 16
        %v628 = vrot.slane %v626, 5
        %v629 = vsel %vm245, %v624, %v628
        %vm678 = vcmask 1042432
        %vm679 = vcmask 1046532
        %vm680 = vmor %vm678, %vm679
        %v681 = vrot.slane %v189, 5
        %v682 = vrot.slane %v681, 4
        %v683 = vrot.slane %v190, 5
        %v684 = vsel %vm680, %v682, %v683
        %v685 = vrot.slane %v683, 4
        %v686 = vrot.slane %v191, 5
        %v687 = vsel %vm680, %v685, %v686
        %v688 = vrot.slane %v192, 5
        %v689 = vrot.slane %v688, 4
        %v690 = vrot.slane %v193, 5
        %v691 = vsel %vm680, %v689, %v690
        %v692 = vrot.slane %v690, 4
        %v693 = vrot.slane %v194, 5
        %v694 = vsel %vm680, %v692, %v693
        %v695 = vrot.slane %v195, 5
        %v696 = vrot.slane %v695, 4
        %v697 = vrot.slane %v196, 5
        %v698 = vsel %vm680, %v696, %v697
        %v699 = vrot.slane %v697, 4
        %v700 = vrot.slane %v197, 5
        %v701 = vsel %vm680, %v699, %v700
        %v702 = vrot.slane %v198, 5
        %v703 = vrot.slane %v702, 4
        %v704 = vrot.slane %v199, 5
        %v705 = vsel %vm680, %v703, %v704
        %v706 = vrot.slane %v704, 4
        %v707 = vrot.slane %v200, 5
        %v708 = vsel %vm680, %v706, %v707
        %v709 = vrot.slane %v201, 5
        %v710 = vrot.slane %v709, 4
        %v711 = vrot.slane %v202, 5
        %v712 = vsel %vm680, %v710, %v711
        %v713 = vrot.slane %v711, 4
        %v714 = vrot.slane %v203, 5
        %v715 = vsel %vm680, %v713, %v714
        %v716 = vrot.slane %v204, 5
        %v717 = vrot.slane %v716, 4
        %v718 = vrot.slane %v205, 5
        %v719 = vsel %vm680, %v717, %v718
        %v720 = vrot.slane %v718, 4
        %v721 = vrot.slane %v206, 5
        %v722 = vsel %vm680, %v720, %v721
        %v723 = vrot.slane %v207, 5
        %v724 = vrot.slane %v723, 4
        %v725 = vrot.slane %v208, 5
        %v726 = vsel %vm680, %v724, %v725
        %v727 = vrot.slane %v725, 4
        %v728 = vrot.slane %v209, 5
        %v729 = vsel %vm680, %v727, %v728
        %v730 = vrot.slane %v210, 5
        %v731 = vrot.slane %v730, 4
        %v732 = vrot.slane %v211, 5
        %v733 = vsel %vm680, %v731, %v732
        %v734 = vrot.slane %v732, 4
        %v735 = vrot.slane %v212, 5
        %v736 = vsel %vm680, %v734, %v735
        %v737 = vrot.slane %v213, 5
        %v738 = vrot.slane %v737, 4
        %v739 = vrot.slane %v214, 5
        %v740 = vsel %vm680, %v738, %v739
        %v741 = vrot.slane %v739, 4
        %v742 = vrot.slane %v215, 5
        %v743 = vsel %vm680, %v741, %v742
        %v744 = vrot.slane %v216, 5
        %v745 = vrot.slane %v744, 4
        %v746 = vrot.slane %v217, 5
        %v747 = vsel %vm680, %v745, %v746
        %v748 = vrot.slane %v746, 4
        %v749 = vrot.slane %v218, 5
        %v750 = vsel %vm680, %v748, %v749
        %v751 = vrot.slane %v219, 5
        %v752 = vrot.slane %v751, 4
        %v753 = vrot.slane %v220, 5
        %v754 = vsel %vm680, %v752, %v753
        %v755 = vrot.slane %v753, 4
        %v756 = vrot.slane %v221, 5
        %v757 = vsel %vm680, %v755, %v756
        %v758 = vrot.slane %v222, 5
        %v759 = vrot.slane %v758, 4
        %v760 = vrot.slane %v223, 5
        %v761 = vsel %vm680, %v759, %v760
        %v762 = vrot.slane %v760, 4
        %v763 = vrot.slane %v224, 5
        %v764 = vsel %vm680, %v762, %v763
        %v765 = vrot.slane %v225, 5
        %v766 = vrot.slane %v765, 4
        %v767 = vrot.slane %v226, 5
        %v768 = vsel %vm680, %v766, %v767
        %v769 = vrot.slane %v767, 4
        %v770 = vrot.slane %v227, 5
        %v771 = vsel %vm680, %v769, %v770
        %v772 = vrot.slane %v228, 5
        %v773 = vrot.slane %v772, 4
        %v774 = vrot.slane %v229, 5
        %v775 = vsel %vm680, %v773, %v774
        %v776 = vrot.slane %v774, 4
        %v777 = vrot.slane %v230, 5
        %v778 = vsel %vm680, %v776, %v777
        %v779 = vrot.slane %v231, 5
        %v780 = vrot.slane %v779, 4
        %v781 = vrot.slane %v232, 5
        %v782 = vsel %vm680, %v780, %v781
        %v783 = vrot.slane %v781, 4
        %v784 = vrot.slane %v233, 5
        %v785 = vsel %vm680, %v783, %v784
        %v786 = vrot.slane %v234, 5
        %v787 = vrot.slane %v786, 4
        %v788 = vrot.slane %v235, 5
        %v789 = vsel %vm680, %v787, %v788
        %v790 = vrot.slane %v788, 4
        %v791 = vrot.slane %v236, 5
        %v792 = vsel %vm680, %v790, %v791
        %v794 = vshrl.u32 %v237, 16
        %v796 = vrot.slane %v794, 4
        %v797 = vshll.u32 %v237, 16
        %v799 = vrot.slane %v797, 5
        %v800 = vor.u32 %v796, %v799
        %v801 = vrot.slane %v800, 4
        %v803 = vshll.u32 %v238, 16
        %v805 = vrot.slane %v803, 5
        %v806 = vsel %vm245, %v801, %v805
        %v807 = vshrl.u32 %v238, 16
        %v809 = vrot.slane %v807, 4
        %v810 = vor.u32 %v809, %v805
        %v811 = vrot.slane %v810, 4
        %v813 = vshll.u32 %v239, 16
        %v815 = vrot.slane %v813, 5
        %v816 = vsel %vm245, %v811, %v815
        %v820 = vrot.slane %v237, 5
        %v821 = vrot.slane %v820, 4
        %v822 = vrot.slane %v238, 5
        %v823 = vsel %vm680, %v821, %v822
        %v824 = vrot.slane %v822, 4
        %v825 = vrot.slane %v239, 5
        %v826 = vsel %vm680, %v824, %v825
        %v828 = vshrl.u32 %v240, 16
        %v830 = vrot.slane %v828, 4
        %v831 = vshll.u32 %v240, 16
        %v833 = vrot.slane %v831, 5
        %v834 = vor.u32 %v830, %v833
        %v835 = vrot.slane %v834, 4
        %v837 = vshll.u32 %v241, 16
        %v839 = vrot.slane %v837, 5
        %v840 = vsel %vm245, %v835, %v839
        %v841 = vshrl.u32 %v241, 16
        %v843 = vrot.slane %v841, 4
        %v844 = vor.u32 %v843, %v839
        %v845 = vrot.slane %v844, 4
        %v847 = vshll.u32 %v242, 16
        %v849 = vrot.slane %v847, 5
        %v850 = vsel %vm245, %v845, %v849
        %v854 = vrot.slane %v240, 5
        %v855 = vrot.slane %v854, 4
        %v856 = vrot.slane %v241, 5
        %v857 = vsel %vm680, %v855, %v856
        %v858 = vrot.slane %v856, 4
        %v859 = vrot.slane %v242, 5
        %v860 = vsel %vm680, %v858, %v859
        %v861 = vunpack.c.l.b16 %v189
        %v862 = vunpack.c.l.b16 %v190
        %v863 = vunpack.c.l.b16 %v192
        %v864 = vunpack.c.l.b16 %v193
        %v865 = vunpack.c.l.b16 %v195
        %v866 = vunpack.c.l.b16 %v196
        %v867 = vunpack.c.l.b16 %v198
        %v868 = vunpack.c.l.b16 %v199
        %v869 = vunpack.c.l.b16 %v201
        %v870 = vunpack.c.l.b16 %v202
        %v871 = vunpack.c.l.b16 %v204
        %v872 = vunpack.c.l.b16 %v205
        %v873 = vunpack.c.l.b16 %v207
        %v874 = vunpack.c.l.b16 %v208
        %v875 = vunpack.c.l.b16 %v210
        %v876 = vunpack.c.l.b16 %v211
        %v877 = vunpack.c.l.b16 %v213
        %v878 = vunpack.c.l.b16 %v214
        %v879 = vunpack.c.l.b16 %v216
        %v880 = vunpack.c.l.b16 %v217
        %v881 = vunpack.c.l.b16 %v219
        %v882 = vunpack.c.l.b16 %v220
        %v883 = vunpack.c.l.b16 %v222
        %v884 = vunpack.c.l.b16 %v223
        %v885 = vunpack.c.l.b16 %v225
        %v886 = vunpack.c.l.b16 %v226
        %v887 = vunpack.c.l.b16 %v228
        %v888 = vunpack.c.l.b16 %v229
        %v889 = vunpack.c.l.b16 %v231
        %v890 = vunpack.c.l.b16 %v232
        %v891 = vunpack.c.l.b16 %v234
        %v892 = vunpack.c.l.b16 %v235
        %v893 = vpack.c.b16 %v862, %v861
        %v894 = vpack.c.b16 %v864, %v863
        %v895 = vpack.c.b16 %v866, %v865
        %v896 = vpack.c.b16 %v868, %v867
        %v897 = vpack.c.b16 %v870, %v869
        %v898 = vpack.c.b16 %v872, %v871
        %v899 = vpack.c.b16 %v874, %v873
        %v900 = vpack.c.b16 %v876, %v875
        %v901 = vpack.c.b16 %v878, %v877
        %v902 = vpack.c.b16 %v880, %v879
        %v903 = vpack.c.b16 %v882, %v881
        %v904 = vpack.c.b16 %v884, %v883
        %v905 = vpack.c.b16 %v886, %v885
        %v906 = vpack.c.b16 %v888, %v887
        %v907 = vpack.c.b16 %v890, %v889
        %v908 = vpack.c.b16 %v892, %v891
        %v909 = vunpack.c.l.b16 %v259
        %v910 = vunpack.c.l.b16 %v269
        %v911 = vunpack.c.l.b16 %v283
        %v912 = vunpack.c.l.b16 %v293
        %v913 = vunpack.c.l.b16 %v307
        %v914 = vunpack.c.l.b16 %v317
        %v915 = vunpack.c.l.b16 %v331
        %v916 = vunpack.c.l.b16 %v341
        %v917 = vunpack.c.l.b16 %v355
        %v918 = vunpack.c.l.b16 %v365
        %v919 = vunpack.c.l.b16 %v379
        %v920 = vunpack.c.l.b16 %v389
        %v921 = vunpack.c.l.b16 %v403
        %v922 = vunpack.c.l.b16 %v413
        %v923 = vunpack.c.l.b16 %v427
        %v924 = vunpack.c.l.b16 %v437
        %v925 = vunpack.c.l.b16 %v451
        %v926 = vunpack.c.l.b16 %v461
        %v927 = vunpack.c.l.b16 %v475
        %v928 = vunpack.c.l.b16 %v485
        %v929 = vunpack.c.l.b16 %v499
        %v930 = vunpack.c.l.b16 %v509
        %v931 = vunpack.c.l.b16 %v523
        %v932 = vunpack.c.l.b16 %v533
        %v933 = vunpack.c.l.b16 %v547
        %v934 = vunpack.c.l.b16 %v557
        %v935 = vunpack.c.l.b16 %v571
        %v936 = vunpack.c.l.b16 %v581
        %v937 = vunpack.c.l.b16 %v595
        %v938 = vunpack.c.l.b16 %v605
        %v939 = vunpack.c.l.b16 %v619
        %v940 = vunpack.c.l.b16 %v629
        %v941 = vpack.c.b16 %v910, %v909
        %v942 = vpack.c.b16 %v912, %v911
        %v943 = vpack.c.b16 %v914, %v913
        %v944 = vpack.c.b16 %v916, %v915
        %v945 = vpack.c.b16 %v918, %v917
        %v946 = vpack.c.b16 %v920, %v919
        %v947 = vpack.c.b16 %v922, %v921
        %v948 = vpack.c.b16 %v924, %v923
        %v949 = vpack.c.b16 %v926, %v925
        %v950 = vpack.c.b16 %v928, %v927
        %v951 = vpack.c.b16 %v930, %v929
        %v952 = vpack.c.b16 %v932, %v931
        %v953 = vpack.c.b16 %v934, %v933
        %v954 = vpack.c.b16 %v936, %v935
        %v955 = vpack.c.b16 %v938, %v937
        %v956 = vpack.c.b16 %v940, %v939
        %957 = vrot.lane.b32.xlu0 %v941, 4
        %v958 = vpop.permute.xlu0 %957
        %959 = vrot.lane.b32.xlu0 %v942, 4
        %v960 = vpop.permute.xlu0 %959
        %961 = vrot.lane.b32.xlu0 %v943, 4
        %v962 = vpop.permute.xlu0 %961
        %963 = vrot.lane.b32.xlu0 %v944, 4
        %v964 = vpop.permute.xlu0 %963
        %965 = vrot.lane.b32.xlu0 %v945, 4
        %v966 = vpop.permute.xlu0 %965
        %967 = vrot.lane.b32.xlu0 %v946, 4
        %v968 = vpop.permute.xlu0 %967
        %969 = vrot.lane.b32.xlu0 %v947, 4
        %v970 = vpop.permute.xlu0 %969
        %971 = vrot.lane.b32.xlu0 %v948, 4
        %v972 = vpop.permute.xlu0 %971
        %973 = vrot.lane.b32.xlu0 %v949, 4
        %v974 = vpop.permute.xlu0 %973
        %975 = vrot.lane.b32.xlu0 %v950, 4
        %v976 = vpop.permute.xlu0 %975
        %977 = vrot.lane.b32.xlu0 %v951, 4
        %v978 = vpop.permute.xlu0 %977
        %979 = vrot.lane.b32.xlu0 %v952, 4
        %v980 = vpop.permute.xlu0 %979
        %981 = vrot.lane.b32.xlu0 %v953, 4
        %v982 = vpop.permute.xlu0 %981
        %983 = vrot.lane.b32.xlu0 %v954, 4
        %v984 = vpop.permute.xlu0 %983
        %985 = vrot.lane.b32.xlu0 %v955, 4
        %v986 = vpop.permute.xlu0 %985
        %987 = vrot.lane.b32.xlu0 %v956, 4
        %v988 = vpop.permute.xlu0 %987
        %v989 = vunpack.c.l.b16 %v684
        %v990 = vunpack.c.l.b16 %v687
        %v991 = vunpack.c.l.b16 %v691
        %v992 = vunpack.c.l.b16 %v694
        %v993 = vunpack.c.l.b16 %v698
        %v994 = vunpack.c.l.b16 %v701
        %v995 = vunpack.c.l.b16 %v705
        %v996 = vunpack.c.l.b16 %v708
        %v997 = vunpack.c.l.b16 %v712
        %v998 = vunpack.c.l.b16 %v715
        %v999 = vunpack.c.l.b16 %v719
        %v1000 = vunpack.c.l.b16 %v722
        %v1001 = vunpack.c.l.b16 %v726
        %v1002 = vunpack.c.l.b16 %v729
        %v1003 = vunpack.c.l.b16 %v733
        %v1004 = vunpack.c.l.b16 %v736
        %v1005 = vunpack.c.l.b16 %v740
        %v1006 = vunpack.c.l.b16 %v743
        %v1007 = vunpack.c.l.b16 %v747
        %v1008 = vunpack.c.l.b16 %v750
        %v1009 = vunpack.c.l.b16 %v754
        %v1010 = vunpack.c.l.b16 %v757
        %v1011 = vunpack.c.l.b16 %v761
        %v1012 = vunpack.c.l.b16 %v764
        %v1013 = vunpack.c.l.b16 %v768
        %v1014 = vunpack.c.l.b16 %v771
        %v1015 = vunpack.c.l.b16 %v775
        %v1016 = vunpack.c.l.b16 %v778
        %v1017 = vunpack.c.l.b16 %v782
        %v1018 = vunpack.c.l.b16 %v785
        %v1019 = vunpack.c.l.b16 %v789
        %v1020 = vunpack.c.l.b16 %v792
        %v1021 = vpack.c.b16 %v990, %v989
        %v1022 = vpack.c.b16 %v992, %v991
        %v1023 = vpack.c.b16 %v994, %v993
        %v1024 = vpack.c.b16 %v996, %v995
        %v1025 = vpack.c.b16 %v998, %v997
        %v1026 = vpack.c.b16 %v1000, %v999
        %v1027 = vpack.c.b16 %v1002, %v1001
        %v1028 = vpack.c.b16 %v1004, %v1003
        %v1029 = vpack.c.b16 %v1006, %v1005
        %v1030 = vpack.c.b16 %v1008, %v1007
        %v1031 = vpack.c.b16 %v1010, %v1009
        %v1032 = vpack.c.b16 %v1012, %v1011
        %v1033 = vpack.c.b16 %v1014, %v1013
        %v1034 = vpack.c.b16 %v1016, %v1015
        %v1035 = vpack.c.b16 %v1018, %v1017
        %v1036 = vpack.c.b16 %v1020, %v1019
        %1037 = vrot.lane.b32.xlu0 %v1021, 8
        %v1038 = vpop.permute.xlu0 %1037
        %1039 = vrot.lane.b32.xlu0 %v1022, 8
        %v1040 = vpop.permute.xlu0 %1039
        %1041 = vrot.lane.b32.xlu0 %v1023, 8
        %v1042 = vpop.permute.xlu0 %1041
        %1043 = vrot.lane.b32.xlu0 %v1024, 8
        %v1044 = vpop.permute.xlu0 %1043
        %1045 = vrot.lane.b32.xlu0 %v1025, 8
        %v1046 = vpop.permute.xlu0 %1045
        %1047 = vrot.lane.b32.xlu0 %v1026, 8
        %v1048 = vpop.permute.xlu0 %1047
        %1049 = vrot.lane.b32.xlu0 %v1027, 8
        %v1050 = vpop.permute.xlu0 %1049
        %1051 = vrot.lane.b32.xlu0 %v1028, 8
        %v1052 = vpop.permute.xlu0 %1051
        %1053 = vrot.lane.b32.xlu0 %v1029, 8
        %v1054 = vpop.permute.xlu0 %1053
        %1055 = vrot.lane.b32.xlu0 %v1030, 8
        %v1056 = vpop.permute.xlu0 %1055
        %1057 = vrot.lane.b32.xlu0 %v1031, 8
        %v1058 = vpop.permute.xlu0 %1057
        %1059 = vrot.lane.b32.xlu0 %v1032, 8
        %v1060 = vpop.permute.xlu0 %1059
        %1061 = vrot.lane.b32.xlu0 %v1033, 8
        %v1062 = vpop.permute.xlu0 %1061
        %1063 = vrot.lane.b32.xlu0 %v1034, 8
        %v1064 = vpop.permute.xlu0 %1063
        %1065 = vrot.lane.b32.xlu0 %v1035, 8
        %v1066 = vpop.permute.xlu0 %1065
        %1067 = vrot.lane.b32.xlu0 %v1036, 8
        %v1068 = vpop.permute.xlu0 %1067
        %v1069 = vunpack.c.l.b16 %v237
        %v1070 = vunpack.c.l.b16 %v238
        %v1071 = vpack.c.b16 %v1070, %v1069
        %1072 = vrot.lane.b32.xlu0 %v894, 12
        %v1073 = vpop.permute.xlu0 %1072
        %1074 = vrot.lane.b32.xlu0 %v895, 12
        %v1075 = vpop.permute.xlu0 %1074
        %1076 = vrot.lane.b32.xlu0 %v896, 12
        %v1077 = vpop.permute.xlu0 %1076
        %1078 = vrot.lane.b32.xlu0 %v897, 12
        %v1079 = vpop.permute.xlu0 %1078
        %1080 = vrot.lane.b32.xlu0 %v898, 12
        %v1081 = vpop.permute.xlu0 %1080
        %1082 = vrot.lane.b32.xlu0 %v899, 12
        %v1083 = vpop.permute.xlu0 %1082
        %1084 = vrot.lane.b32.xlu0 %v900, 12
        %v1085 = vpop.permute.xlu0 %1084
        %1086 = vrot.lane.b32.xlu0 %v901, 12
        %v1087 = vpop.permute.xlu0 %1086
        %1088 = vrot.lane.b32.xlu0 %v902, 12
        %v1089 = vpop.permute.xlu0 %1088
        %1090 = vrot.lane.b32.xlu0 %v903, 12
        %v1091 = vpop.permute.xlu0 %1090
        %1092 = vrot.lane.b32.xlu0 %v904, 12
        %v1093 = vpop.permute.xlu0 %1092
        %1094 = vrot.lane.b32.xlu0 %v905, 12
        %v1095 = vpop.permute.xlu0 %1094
        %1096 = vrot.lane.b32.xlu0 %v906, 12
        %v1097 = vpop.permute.xlu0 %1096
        %1098 = vrot.lane.b32.xlu0 %v907, 12
        %v1099 = vpop.permute.xlu0 %1098
        %1100 = vrot.lane.b32.xlu0 %v908, 12
        %v1101 = vpop.permute.xlu0 %1100
        %1102 = vrot.lane.b32.xlu0 %v1071, 12
        %v1103 = vpop.permute.xlu0 %1102
        %v1104 = vunpack.c.l.b16 %v806
        %v1105 = vunpack.c.l.b16 %v816
        %v1106 = vpack.c.b16 %v1105, %v1104
        %1107 = vrot.lane.b32.xlu0 %v942, 16
        %v1108 = vpop.permute.xlu0 %1107
        %1109 = vrot.lane.b32.xlu0 %v943, 16
        %v1110 = vpop.permute.xlu0 %1109
        %1111 = vrot.lane.b32.xlu0 %v944, 16
        %v1112 = vpop.permute.xlu0 %1111
        %1113 = vrot.lane.b32.xlu0 %v945, 16
        %v1114 = vpop.permute.xlu0 %1113
        %1115 = vrot.lane.b32.xlu0 %v946, 16
        %v1116 = vpop.permute.xlu0 %1115
        %1117 = vrot.lane.b32.xlu0 %v947, 16
        %v1118 = vpop.permute.xlu0 %1117
        %1119 = vrot.lane.b32.xlu0 %v948, 16
        %v1120 = vpop.permute.xlu0 %1119
        %1121 = vrot.lane.b32.xlu0 %v949, 16
        %v1122 = vpop.permute.xlu0 %1121
        %1123 = vrot.lane.b32.xlu0 %v950, 16
        %v1124 = vpop.permute.xlu0 %1123
        %1125 = vrot.lane.b32.xlu0 %v951, 16
        %v1126 = vpop.permute.xlu0 %1125
        %1127 = vrot.lane.b32.xlu0 %v952, 16
        %v1128 = vpop.permute.xlu0 %1127
        %1129 = vrot.lane.b32.xlu0 %v953, 16
        %v1130 = vpop.permute.xlu0 %1129
        %1131 = vrot.lane.b32.xlu0 %v954, 16
        %v1132 = vpop.permute.xlu0 %1131
        %1133 = vrot.lane.b32.xlu0 %v955, 16
        %v1134 = vpop.permute.xlu0 %1133
        %1135 = vrot.lane.b32.xlu0 %v956, 16
        %v1136 = vpop.permute.xlu0 %1135
        %1137 = vrot.lane.b32.xlu0 %v1106, 16
        %v1138 = vpop.permute.xlu0 %1137
        %v1139 = vunpack.c.l.b16 %v823
        %v1140 = vunpack.c.l.b16 %v826
        %v1141 = vpack.c.b16 %v1140, %v1139
        %1142 = vrot.lane.b32.xlu0 %v1022, 20
        %v1143 = vpop.permute.xlu0 %1142
        %1144 = vrot.lane.b32.xlu0 %v1023, 20
        %v1145 = vpop.permute.xlu0 %1144
        %1146 = vrot.lane.b32.xlu0 %v1024, 20
        %v1147 = vpop.permute.xlu0 %1146
        %1148 = vrot.lane.b32.xlu0 %v1025, 20
        %v1149 = vpop.permute.xlu0 %1148
        %1150 = vrot.lane.b32.xlu0 %v1026, 20
        %v1151 = vpop.permute.xlu0 %1150
        %1152 = vrot.lane.b32.xlu0 %v1027, 20
        %v1153 = vpop.permute.xlu0 %1152
        %1154 = vrot.lane.b32.xlu0 %v1028, 20
        %v1155 = vpop.permute.xlu0 %1154
        %1156 = vrot.lane.b32.xlu0 %v1029, 20
        %v1157 = vpop.permute.xlu0 %1156
        %1158 = vrot.lane.b32.xlu0 %v1030, 20
        %v1159 = vpop.permute.xlu0 %1158
        %1160 = vrot.lane.b32.xlu0 %v1031, 20
        %v1161 = vpop.permute.xlu0 %1160
        %1162 = vrot.lane.b32.xlu0 %v1032, 20
        %v1163 = vpop.permute.xlu0 %1162
        %1164 = vrot.lane.b32.xlu0 %v1033, 20
        %v1165 = vpop.permute.xlu0 %1164
        %1166 = vrot.lane.b32.xlu0 %v1034, 20
        %v1167 = vpop.permute.xlu0 %1166
        %1168 = vrot.lane.b32.xlu0 %v1035, 20
        %v1169 = vpop.permute.xlu0 %1168
        %1170 = vrot.lane.b32.xlu0 %v1036, 20
        %v1171 = vpop.permute.xlu0 %1170
        %1172 = vrot.lane.b32.xlu0 %v1141, 20
        %v1173 = vpop.permute.xlu0 %1172
        %v1174 = vunpack.c.l.b16 %v240
        %v1175 = vunpack.c.l.b16 %v241
        %v1176 = vpack.c.b16 %v1175, %v1174
        %1177 = vrot.lane.b32.xlu0 %v895, 24
        %v1178 = vpop.permute.xlu0 %1177
        %1179 = vrot.lane.b32.xlu0 %v896, 24
        %v1180 = vpop.permute.xlu0 %1179
        %1181 = vrot.lane.b32.xlu0 %v897, 24
        %v1182 = vpop.permute.xlu0 %1181
        %1183 = vrot.lane.b32.xlu0 %v898, 24
        %v1184 = vpop.permute.xlu0 %1183
        %1185 = vrot.lane.b32.xlu0 %v899, 24
        %v1186 = vpop.permute.xlu0 %1185
        %1187 = vrot.lane.b32.xlu0 %v900, 24
        %v1188 = vpop.permute.xlu0 %1187
        %1189 = vrot.lane.b32.xlu0 %v901, 24
        %v1190 = vpop.permute.xlu0 %1189
        %1191 = vrot.lane.b32.xlu0 %v902, 24
        %v1192 = vpop.permute.xlu0 %1191
        %1193 = vrot.lane.b32.xlu0 %v903, 24
        %v1194 = vpop.permute.xlu0 %1193
        %1195 = vrot.lane.b32.xlu0 %v904, 24
        %v1196 = vpop.permute.xlu0 %1195
        %1197 = vrot.lane.b32.xlu0 %v905, 24
        %v1198 = vpop.permute.xlu0 %1197
        %1199 = vrot.lane.b32.xlu0 %v906, 24
        %v1200 = vpop.permute.xlu0 %1199
        %1201 = vrot.lane.b32.xlu0 %v907, 24
        %v1202 = vpop.permute.xlu0 %1201
        %1203 = vrot.lane.b32.xlu0 %v908, 24
        %v1204 = vpop.permute.xlu0 %1203
        %1205 = vrot.lane.b32.xlu0 %v1071, 24
        %v1206 = vpop.permute.xlu0 %1205
        %1207 = vrot.lane.b32.xlu0 %v1176, 24
        %v1208 = vpop.permute.xlu0 %1207
        %v1209 = vunpack.c.l.b16 %v840
        %v1210 = vunpack.c.l.b16 %v850
        %v1211 = vpack.c.b16 %v1210, %v1209
        %1212 = vrot.lane.b32.xlu0 %v943, 28
        %v1213 = vpop.permute.xlu0 %1212
        %1214 = vrot.lane.b32.xlu0 %v944, 28
        %v1215 = vpop.permute.xlu0 %1214
        %1216 = vrot.lane.b32.xlu0 %v945, 28
        %v1217 = vpop.permute.xlu0 %1216
        %1218 = vrot.lane.b32.xlu0 %v946, 28
        %v1219 = vpop.permute.xlu0 %1218
        %1220 = vrot.lane.b32.xlu0 %v947, 28
        %v1221 = vpop.permute.xlu0 %1220
        %1222 = vrot.lane.b32.xlu0 %v948, 28
        %v1223 = vpop.permute.xlu0 %1222
        %1224 = vrot.lane.b32.xlu0 %v949, 28
        %v1225 = vpop.permute.xlu0 %1224
        %1226 = vrot.lane.b32.xlu0 %v950, 28
        %v1227 = vpop.permute.xlu0 %1226
        %1228 = vrot.lane.b32.xlu0 %v951, 28
        %v1229 = vpop.permute.xlu0 %1228
        %1230 = vrot.lane.b32.xlu0 %v952, 28
        %v1231 = vpop.permute.xlu0 %1230
        %1232 = vrot.lane.b32.xlu0 %v953, 28
        %v1233 = vpop.permute.xlu0 %1232
        %1234 = vrot.lane.b32.xlu0 %v954, 28
        %v1235 = vpop.permute.xlu0 %1234
        %1236 = vrot.lane.b32.xlu0 %v955, 28
        %v1237 = vpop.permute.xlu0 %1236
        %1238 = vrot.lane.b32.xlu0 %v956, 28
        %v1239 = vpop.permute.xlu0 %1238
        %1240 = vrot.lane.b32.xlu0 %v1106, 28
        %v1241 = vpop.permute.xlu0 %1240
        %1242 = vrot.lane.b32.xlu0 %v1211, 28
        %v1243 = vpop.permute.xlu0 %1242
        %v1244 = vunpack.c.l.b16 %v857
        %v1245 = vunpack.c.l.b16 %v860
        %v1246 = vpack.c.b16 %v1245, %v1244
        %1247 = vrot.lane.b32.xlu0 %v1023, 32
        %v1248 = vpop.permute.xlu0 %1247
        %1249 = vrot.lane.b32.xlu0 %v1024, 32
        %v1250 = vpop.permute.xlu0 %1249
        %1251 = vrot.lane.b32.xlu0 %v1025, 32
        %v1252 = vpop.permute.xlu0 %1251
        %1253 = vrot.lane.b32.xlu0 %v1026, 32
        %v1254 = vpop.permute.xlu0 %1253
        %1255 = vrot.lane.b32.xlu0 %v1027, 32
        %v1256 = vpop.permute.xlu0 %1255
        %1257 = vrot.lane.b32.xlu0 %v1028, 32
        %v1258 = vpop.permute.xlu0 %1257
        %1259 = vrot.lane.b32.xlu0 %v1029, 32
        %v1260 = vpop.permute.xlu0 %1259
        %1261 = vrot.lane.b32.xlu0 %v1030, 32
        %v1262 = vpop.permute.xlu0 %1261
        %1263 = vrot.lane.b32.xlu0 %v1031, 32
        %v1264 = vpop.permute.xlu0 %1263
        %1265 = vrot.lane.b32.xlu0 %v1032, 32
        %v1266 = vpop.permute.xlu0 %1265
        %1267 = vrot.lane.b32.xlu0 %v1033, 32
        %v1268 = vpop.permute.xlu0 %1267
        %1269 = vrot.lane.b32.xlu0 %v1034, 32
        %v1270 = vpop.permute.xlu0 %1269
        %1271 = vrot.lane.b32.xlu0 %v1035, 32
        %v1272 = vpop.permute.xlu0 %1271
        %1273 = vrot.lane.b32.xlu0 %v1036, 32
        %v1274 = vpop.permute.xlu0 %1273
        %1275 = vrot.lane.b32.xlu0 %v1141, 32
        %v1276 = vpop.permute.xlu0 %1275
        %1277 = vrot.lane.b32.xlu0 %v1246, 32
        %v1278 = vpop.permute.xlu0 %1277
        %vm1279 = vcmask 31744
        %v1282 = vsel %vm1279, %v893, %v958
        %v1285 = vsel %vm1279, %v894, %v960
        %v1288 = vsel %vm1279, %v895, %v962
        %v1291 = vsel %vm1279, %v896, %v964
        %v1294 = vsel %vm1279, %v897, %v966
        %v1297 = vsel %vm1279, %v898, %v968
        %v1300 = vsel %vm1279, %v899, %v970
        %v1303 = vsel %vm1279, %v900, %v972
        %v1306 = vsel %vm1279, %v901, %v974
        %v1309 = vsel %vm1279, %v902, %v976
        %v1312 = vsel %vm1279, %v903, %v978
        %v1315 = vsel %vm1279, %v904, %v980
        %v1318 = vsel %vm1279, %v905, %v982
        %v1321 = vsel %vm1279, %v906, %v984
        %v1324 = vsel %vm1279, %v907, %v986
        %v1327 = vsel %vm1279, %v908, %v988
        %vm1328 = vcmask 64512
        %v1330 = vsel %vm1328, %v1282, %v1038
        %v1332 = vsel %vm1328, %v1285, %v1040
        %v1334 = vsel %vm1328, %v1288, %v1042
        %v1336 = vsel %vm1328, %v1291, %v1044
        %v1338 = vsel %vm1328, %v1294, %v1046
        %v1340 = vsel %vm1328, %v1297, %v1048
        %v1342 = vsel %vm1328, %v1300, %v1050
        %v1344 = vsel %vm1328, %v1303, %v1052
        %v1346 = vsel %vm1328, %v1306, %v1054
        %v1348 = vsel %vm1328, %v1309, %v1056
        %v1350 = vsel %vm1328, %v1312, %v1058
        %v1352 = vsel %vm1328, %v1315, %v1060
        %v1354 = vsel %vm1328, %v1318, %v1062
        %v1356 = vsel %vm1328, %v1321, %v1064
        %v1358 = vsel %vm1328, %v1324, %v1066
        %v1360 = vsel %vm1328, %v1327, %v1068
        %vm1361 = vcmask 97280
        %v1363 = vsel %vm1361, %v1330, %v1073
        %v1365 = vsel %vm1361, %v1332, %v1075
        %v1367 = vsel %vm1361, %v1334, %v1077
        %v1369 = vsel %vm1361, %v1336, %v1079
        %v1371 = vsel %vm1361, %v1338, %v1081
        %v1373 = vsel %vm1361, %v1340, %v1083
        %v1375 = vsel %vm1361, %v1342, %v1085
        %v1377 = vsel %vm1361, %v1344, %v1087
        %v1379 = vsel %vm1361, %v1346, %v1089
        %v1381 = vsel %vm1361, %v1348, %v1091
        %v1383 = vsel %vm1361, %v1350, %v1093
        %v1385 = vsel %vm1361, %v1352, %v1095
        %v1387 = vsel %vm1361, %v1354, %v1097
        %v1389 = vsel %vm1361, %v1356, %v1099
        %v1391 = vsel %vm1361, %v1358, %v1101
        %v1393 = vsel %vm1361, %v1360, %v1103
        %vm1394 = vcmask 130048
        %v1396 = vsel %vm1394, %v1363, %v1108
        %v1398 = vsel %vm1394, %v1365, %v1110
        %v1400 = vsel %vm1394, %v1367, %v1112
        %v1402 = vsel %vm1394, %v1369, %v1114
        %v1404 = vsel %vm1394, %v1371, %v1116
        %v1406 = vsel %vm1394, %v1373, %v1118
        %v1408 = vsel %vm1394, %v1375, %v1120
        %v1410 = vsel %vm1394, %v1377, %v1122
        %v1412 = vsel %vm1394, %v1379, %v1124
        %v1414 = vsel %vm1394, %v1381, %v1126
        %v1416 = vsel %vm1394, %v1383, %v1128
        %v1418 = vsel %vm1394, %v1385, %v1130
        %v1420 = vsel %vm1394, %v1387, %v1132
        %v1422 = vsel %vm1394, %v1389, %v1134
        %v1424 = vsel %vm1394, %v1391, %v1136
        %v1426 = vsel %vm1394, %v1393, %v1138
        %vm1427 = vcmask 162816
        %v1429 = vsel %vm1427, %v1396, %v1143
        %v1431 = vsel %vm1427, %v1398, %v1145
        %v1433 = vsel %vm1427, %v1400, %v1147
        %v1435 = vsel %vm1427, %v1402, %v1149
        %v1437 = vsel %vm1427, %v1404, %v1151
        %v1439 = vsel %vm1427, %v1406, %v1153
        %v1441 = vsel %vm1427, %v1408, %v1155
        %v1443 = vsel %vm1427, %v1410, %v1157
        %v1445 = vsel %vm1427, %v1412, %v1159
        %v1447 = vsel %vm1427, %v1414, %v1161
        %v1449 = vsel %vm1427, %v1416, %v1163
        %v1451 = vsel %vm1427, %v1418, %v1165
        %v1453 = vsel %vm1427, %v1420, %v1167
        %v1455 = vsel %vm1427, %v1422, %v1169
        %v1457 = vsel %vm1427, %v1424, %v1171
        %v1459 = vsel %vm1427, %v1426, %v1173
        %vm1460 = vcmask 195584
        %v1462 = vsel %vm1460, %v1429, %v1178
        %v1464 = vsel %vm1460, %v1431, %v1180
        %v1466 = vsel %vm1460, %v1433, %v1182
        %v1468 = vsel %vm1460, %v1435, %v1184
        %v1470 = vsel %vm1460, %v1437, %v1186
        %v1472 = vsel %vm1460, %v1439, %v1188
        %v1474 = vsel %vm1460, %v1441, %v1190
        %v1476 = vsel %vm1460, %v1443, %v1192
        %v1478 = vsel %vm1460, %v1445, %v1194
        %v1480 = vsel %vm1460, %v1447, %v1196
        %v1482 = vsel %vm1460, %v1449, %v1198
        %v1484 = vsel %vm1460, %v1451, %v1200
        %v1486 = vsel %vm1460, %v1453, %v1202
        %v1488 = vsel %vm1460, %v1455, %v1204
        %v1490 = vsel %vm1460, %v1457, %v1206
        %v1492 = vsel %vm1460, %v1459, %v1208
        %vm1493 = vcmask 228352
        %v1495 = vsel %vm1493, %v1462, %v1213
        %v1497 = vsel %vm1493, %v1464, %v1215
        %v1499 = vsel %vm1493, %v1466, %v1217
        %v1501 = vsel %vm1493, %v1468, %v1219
        %v1503 = vsel %vm1493, %v1470, %v1221
        %v1505 = vsel %vm1493, %v1472, %v1223
        %v1507 = vsel %vm1493, %v1474, %v1225
        %v1509 = vsel %vm1493, %v1476, %v1227
        %v1511 = vsel %vm1493, %v1478, %v1229
        %v1513 = vsel %vm1493, %v1480, %v1231
        %v1515 = vsel %vm1493, %v1482, %v1233
        %v1517 = vsel %vm1493, %v1484, %v1235
        %v1519 = vsel %vm1493, %v1486, %v1237
        %v1521 = vsel %vm1493, %v1488, %v1239
        %v1523 = vsel %vm1493, %v1490, %v1241
        %v1525 = vsel %vm1493, %v1492, %v1243
        %vm1526 = vcmask 261120
        %v1528 = vsel %vm1526, %v1495, %v1248
        %v1530 = vsel %vm1526, %v1497, %v1250
        %v1532 = vsel %vm1526, %v1499, %v1252
        %v1534 = vsel %vm1526, %v1501, %v1254
        %v1536 = vsel %vm1526, %v1503, %v1256
        %v1538 = vsel %vm1526, %v1505, %v1258
        %v1540 = vsel %vm1526, %v1507, %v1260
        %v1542 = vsel %vm1526, %v1509, %v1262
        %v1544 = vsel %vm1526, %v1511, %v1264
        %v1546 = vsel %vm1526, %v1513, %v1266
        %v1548 = vsel %vm1526, %v1515, %v1268
        %v1550 = vsel %vm1526, %v1517, %v1270
        %v1552 = vsel %vm1526, %v1519, %v1272
        %v1554 = vsel %vm1526, %v1521, %v1274
        %v1556 = vsel %vm1526, %v1523, %v1276
        %v1558 = vsel %vm1526, %v1525, %v1278
        %v1559 = vld [vmem:[%s1] sm:$0xf]
        %v1560 = vld [vmem:[%s1 + $0x4] sm:$0xf]
        %v1561 = vld [vmem:[%s1 + $0x8] sm:$0xf]
        %v1562 = vld [vmem:[%s1 + $0xc] sm:$0xf]
        %v1563 = vld [vmem:[%s1 + $0x10] sm:$0x3]
        %v1564 = vld [vmem:[%s2] sm:$0x1]
        %v1566 = vperm.slane %v1564, 0
        %v1573 = vunpack.c.l.b16 %v1559
        %v1574 = vunpack.c.l.b16 %v1560
        %v1575 = vunpack.c.l.b16 %v1561
        %v1576 = vunpack.c.l.b16 %v1562
        %v1577 = vunpack.c.l.b16 %v1563
        %v1578 = vpack.c.b16 %v1574, %v1573
        %v1579 = vpack.c.b16 %v1576, %v1575
        %v1580 = vpack.c.b16 %v1577, %v1577
        %vm1583 = vcmask 293888
        %v1584 = vsel %vm1583, %v1528, 0
        %v1586 = vsel %vm1583, %v1530, 0
        %v1588 = vsel %vm1583, %v1532, 0
        %v1590 = vsel %vm1583, %v1534, 0
        %v1592 = vsel %vm1583, %v1536, 0
        %v1594 = vsel %vm1583, %v1538, 0
        %v1596 = vsel %vm1583, %v1540, 0
        %v1598 = vsel %vm1583, %v1542, 0
        %v1600 = vsel %vm1583, %v1544, 0
        %v1602 = vsel %vm1583, %v1546, 0
        %v1604 = vsel %vm1583, %v1548, 0
        %v1606 = vsel %vm1583, %v1550, 0
        %v1608 = vsel %vm1583, %v1552, 0
        %v1610 = vsel %vm1583, %v1554, 0
        %v1612 = vsel %vm1583, %v1556, 0
        %v1614 = vsel %vm1583, %v1558, 0
        %vm1616 = vcmask 1041408
        %v1618 = vsel %vm1616, %v1580, 0
        %1620 = vmatpush.bf16.msra.mxu0 0
        %1621 = vmatpush.bf16.msra.mxu0 0
        %1622 = vmatpush.bf16.msra.mxu0 0
        %1623 = vmatpush.bf16.msra.mxu0 0
        %1624 = vmatpush.bf16.msra.mxu0 0
        %1625 = vmatpush.bf16.msra.mxu0 %v1618
        %1626 = vmatpush.bf16.msra.mxu0 %v1579
        %1627 = vmatpush.bf16.msra.mxu0 %v1578
        %1628 = vmatmul.bf16.gmra.mxu0 %v1584
        %v1629 = vpop.f32.mrf.mxu0
        %v1630 = vadd.f32 %v1566, %v1629
        %v1631 = vpop.f32.mrf.mxu0
        %v1632 = vadd.f32 %v1566, %v1631
        %1633 = vmatmul.bf16.gmra.mxu0 %v1586
        %v1634 = vpop.f32.mrf.mxu0
        %v1635 = vadd.f32 %v1566, %v1634
        %v1636 = vpop.f32.mrf.mxu0
        %v1637 = vadd.f32 %v1566, %v1636
        %1638 = vmatmul.bf16.gmra.mxu0 %v1588
        %v1639 = vpop.f32.mrf.mxu0
        %v1640 = vadd.f32 %v1566, %v1639
        %v1641 = vpop.f32.mrf.mxu0
        %v1642 = vadd.f32 %v1566, %v1641
        %1643 = vmatmul.bf16.gmra.mxu0 %v1590
        %v1644 = vpop.f32.mrf.mxu0
        %v1645 = vadd.f32 %v1566, %v1644
        %v1646 = vpop.f32.mrf.mxu0
        %v1647 = vadd.f32 %v1566, %v1646
        %1648 = vmatmul.bf16.gmra.mxu0 %v1592
        %v1649 = vpop.f32.mrf.mxu0
        %v1650 = vadd.f32 %v1566, %v1649
        %v1651 = vpop.f32.mrf.mxu0
        %v1652 = vadd.f32 %v1566, %v1651
        %1653 = vmatmul.bf16.gmra.mxu0 %v1594
        %v1654 = vpop.f32.mrf.mxu0
        %v1655 = vadd.f32 %v1566, %v1654
        %v1656 = vpop.f32.mrf.mxu0
        %v1657 = vadd.f32 %v1566, %v1656
        %1658 = vmatmul.bf16.gmra.mxu0 %v1596
        %v1659 = vpop.f32.mrf.mxu0
        %v1660 = vadd.f32 %v1566, %v1659
        %v1661 = vpop.f32.mrf.mxu0
        %v1662 = vadd.f32 %v1566, %v1661
        %1663 = vmatmul.bf16.gmra.mxu0 %v1598
        %v1664 = vpop.f32.mrf.mxu0
        %v1665 = vadd.f32 %v1566, %v1664
        %v1666 = vpop.f32.mrf.mxu0
        %v1667 = vadd.f32 %v1566, %v1666
        %1668 = vmatmul.bf16.gmra.mxu0 %v1600
        %v1669 = vpop.f32.mrf.mxu0
        %v1670 = vadd.f32 %v1566, %v1669
        %v1671 = vpop.f32.mrf.mxu0
        %v1672 = vadd.f32 %v1566, %v1671
        %1673 = vmatmul.bf16.gmra.mxu0 %v1602
        %v1674 = vpop.f32.mrf.mxu0
        %v1675 = vadd.f32 %v1566, %v1674
        %v1676 = vpop.f32.mrf.mxu0
        %v1677 = vadd.f32 %v1566, %v1676
        %1678 = vmatmul.bf16.gmra.mxu0 %v1604
        %v1679 = vpop.f32.mrf.mxu0
        %v1680 = vadd.f32 %v1566, %v1679
        %v1681 = vpop.f32.mrf.mxu0
        %v1682 = vadd.f32 %v1566, %v1681
        %1683 = vmatmul.bf16.gmra.mxu0 %v1606
        %v1684 = vpop.f32.mrf.mxu0
        %v1685 = vadd.f32 %v1566, %v1684
        %v1686 = vpop.f32.mrf.mxu0
        %v1687 = vadd.f32 %v1566, %v1686
        %1688 = vmatmul.bf16.gmra.mxu0 %v1608
        %v1689 = vpop.f32.mrf.mxu0
        %v1690 = vadd.f32 %v1566, %v1689
        %v1691 = vpop.f32.mrf.mxu0
        %v1692 = vadd.f32 %v1566, %v1691
        %1693 = vmatmul.bf16.gmra.mxu0 %v1610
        %v1694 = vpop.f32.mrf.mxu0
        %v1695 = vadd.f32 %v1566, %v1694
        %v1696 = vpop.f32.mrf.mxu0
        %v1697 = vadd.f32 %v1566, %v1696
        %1698 = vmatmul.bf16.gmra.mxu0 %v1612
        %v1699 = vpop.f32.mrf.mxu0
        %v1700 = vadd.f32 %v1566, %v1699
        %v1701 = vpop.f32.mrf.mxu0
        %v1702 = vadd.f32 %v1566, %v1701
        %1703 = vmatmul.bf16.gmra.mxu0 %v1614
        %v1704 = vpop.f32.mrf.mxu0
        %v1705 = vadd.f32 %v1566, %v1704
        %v1706 = vpop.f32.mrf.mxu0
        %v1707 = vadd.f32 %v1566, %v1706
        %1708 = vdwg.mxu0
        %v1709 = vmax.f32 %v1630, 0.0
        %v1710 = vmax.f32 %v1632, 0.0
        %v1711 = vmax.f32 %v1635, 0.0
        %v1712 = vmax.f32 %v1637, 0.0
        %v1713 = vmax.f32 %v1640, 0.0
        %v1714 = vmax.f32 %v1642, 0.0
        %v1715 = vmax.f32 %v1645, 0.0
        %v1716 = vmax.f32 %v1647, 0.0
        %v1717 = vmax.f32 %v1650, 0.0
        %v1718 = vmax.f32 %v1652, 0.0
        %v1719 = vmax.f32 %v1655, 0.0
        %v1720 = vmax.f32 %v1657, 0.0
        %v1721 = vmax.f32 %v1660, 0.0
        %v1722 = vmax.f32 %v1662, 0.0
        %v1723 = vmax.f32 %v1665, 0.0
        %v1724 = vmax.f32 %v1667, 0.0
        %v1725 = vmax.f32 %v1670, 0.0
        %v1726 = vmax.f32 %v1672, 0.0
        %v1727 = vmax.f32 %v1675, 0.0
        %v1728 = vmax.f32 %v1677, 0.0
        %v1729 = vmax.f32 %v1680, 0.0
        %v1730 = vmax.f32 %v1682, 0.0
        %v1731 = vmax.f32 %v1685, 0.0
        %v1732 = vmax.f32 %v1687, 0.0
        %v1733 = vmax.f32 %v1690, 0.0
        %v1734 = vmax.f32 %v1692, 0.0
        %v1735 = vmax.f32 %v1695, 0.0
        %v1736 = vmax.f32 %v1697, 0.0
        %v1737 = vmax.f32 %v1700, 0.0
        %v1738 = vmax.f32 %v1702, 0.0
        %v1739 = vmax.f32 %v1705, 0.0
        %v1740 = vmax.f32 %v1707, 0.0
        %1741 = vst.msk [vmem:[%s177] sm:$0xff] %vm1526, %v1709
        %1742 = vst.msk [vmem:[%s177 + $0x8] sm:$0xff] %vm1526, %v1710
        %1743 = vst.msk [vmem:[%s177 + $0x10] sm:$0xff] %vm1526, %v1711
        %1744 = vst.msk [vmem:[%s177 + $0x18] sm:$0xff] %vm1526, %v1712
        %1745 = vst.msk [vmem:[%s177 + $0x20] sm:$0xff] %vm1526, %v1713
        %1746 = vst.msk [vmem:[%s177 + $0x28] sm:$0xff] %vm1526, %v1714
        %1747 = vst.msk [vmem:[%s177 + $0x30] sm:$0xff] %vm1526, %v1715
        %1748 = vst.msk [vmem:[%s177 + $0x38] sm:$0xff] %vm1526, %v1716
        %1749 = vst.msk [vmem:[%s177 + $0x40] sm:$0xff] %vm1526, %v1717
        %1750 = vst.msk [vmem:[%s177 + $0x48] sm:$0xff] %vm1526, %v1718
        %1751 = vst.msk [vmem:[%s177 + $0x50] sm:$0xff] %vm1526, %v1719
        %1752 = vst.msk [vmem:[%s177 + $0x58] sm:$0xff] %vm1526, %v1720
        %1753 = vst.msk [vmem:[%s177 + $0x60] sm:$0xff] %vm1526, %v1721
        %1754 = vst.msk [vmem:[%s177 + $0x68] sm:$0xff] %vm1526, %v1722
        %1755 = vst.msk [vmem:[%s177 + $0x70] sm:$0xff] %vm1526, %v1723
        %1756 = vst.msk [vmem:[%s177 + $0x78] sm:$0xff] %vm1526, %v1724
        %1757 = vst.msk [vmem:[%s177 + $0x80] sm:$0xff] %vm1526, %v1725
        %1758 = vst.msk [vmem:[%s177 + $0x88] sm:$0xff] %vm1526, %v1726
        %1759 = vst.msk [vmem:[%s177 + $0x90] sm:$0xff] %vm1526, %v1727
        %1760 = vst.msk [vmem:[%s177 + $0x98] sm:$0xff] %vm1526, %v1728
        %1761 = vst.msk [vmem:[%s177 + $0xa0] sm:$0xff] %vm1526, %v1729
        %1762 = vst.msk [vmem:[%s177 + $0xa8] sm:$0xff] %vm1526, %v1730
        %1763 = vst.msk [vmem:[%s177 + $0xb0] sm:$0xff] %vm1526, %v1731
        %1764 = vst.msk [vmem:[%s177 + $0xb8] sm:$0xff] %vm1526, %v1732
        %1765 = vst.msk [vmem:[%s177 + $0xc0] sm:$0xff] %vm1526, %v1733
        %1766 = vst.msk [vmem:[%s177 + $0xc8] sm:$0xff] %vm1526, %v1734
        %1767 = vst.msk [vmem:[%s177 + $0xd0] sm:$0xff] %vm1526, %v1735
        %1768 = vst.msk [vmem:[%s177 + $0xd8] sm:$0xff] %vm1526, %v1736
        %1769 = vst.msk [vmem:[%s177 + $0xe0] sm:$0xff] %vm1526, %v1737
        %1770 = vst.msk [vmem:[%s177 + $0xe8] sm:$0xff] %vm1526, %v1738
        %1771 = vst.msk [vmem:[%s177 + $0xf0] sm:$0xff] %vm1526, %v1739
        %1772 = vst.msk [vmem:[%s177 + $0xf8] sm:$0xff] %vm1526, %v1740
        %s1773 = sand.u32 %s107, 1
        %s1774 = scalar_lea.sflag [#allocation3], %s1773
        %s1775 = sand.u32 %s107, 1
        %s1776 = smul.addr %s1775, 256
        %s1777 = scalar_lea.vmem [#allocation2], %s1776
        // Predicated region
        $region33: #{a_call__.1} parent=31 // pred_check
          %p1778 = pneg %p117
        $region34: #{a_call__.1} parent=31 // pred_check_branch
          %1780 = sbr.rel (%p1778) target = $region36
        $region35: #{a_call__.1} parent=31 // pred_region
          %s1781 = smul.u32 16, %s22
          %1783 = vsyncadd %s1774, 0
          %s1784 = smul.addr %s1781, 2
          %s1785 = smul.addr %s21, 32
          %s1786 = sadd.s32 %s1784, %s1785
          %s1787 = smul.addr %s1786, 8
          %s1788 = scalar_lea.hbm %s3, %s1787
          %s1789 = sshll.u32 %s1777, 4
          %s1790 = int_to_ptr.vmem [resolvable:$true] %s1789
          %s1791 = sshll.u32 %s1788, 4
          %s1792 = int_to_ptr.hbm [resolvable:$true] %s1791
          %1797 = dma.vmem_to_hbm [thread:$0]  %s1790, 4096, %s1792, %s1774, 128, 128, 8
        $region36: #{a_call__.1} parent=31 // pred_fallthru
          _
      $region32: #{a_call__.1} parent=5 // pred_fallthru
        _
      %p1798 = scmp.le.s32.totalorder 2, %s12
      // Predicated region
      $region37: #{a_call__.1} parent=5 // pred_check
        %p1799 = pneg %p1798
      $region38: #{a_call__.1} parent=5 // pred_check_branch
        %1801 = sbr.rel (%p1799) target = $region40
      $region39: #{a_call__.1} parent=5 // pred_region
        %s1802 = ssub.s32 %s12, 2
        // Predicated region
        $region41: #{a_call__.1} parent=39 // pred_check
          %p1803 = pneg %p123
        $region42: #{a_call__.1} parent=39 // pred_check_branch
          %1805 = sbr.rel (%p1803) target = $region44
        $region43: #{a_call__.1} parent=39 // pred_region
          %s1806 = sand.u32 %s108, 1
          %s1807 = scalar_lea.sflag [#allocation3], %s1806
          %s1808 = sand.u32 %s108, 1
          %s1809 = smul.addr %s1808, 256
          %s1810 = scalar_lea.vmem [#allocation2], %s1809
          %1812 = dma.done %s1807, 4096
        $region44: #{a_call__.1} parent=39 // pred_fallthru
          _
      $region40: #{a_call__.1} parent=5 // pred_fallthru
        _
    $region6: #{a_call__.1} parent=1 // loop_footer
      %s16 = sadd.s32 1, %s12
    $region7: #{a_call__.1} parent=1 // loop_footer_branch
      %11 = sbr.rel target = $region3
    $region8: #{a_call__.1} parent=1 // loop_exit
      _
    %1813 = vsyncpa [#allocation3], 1
    %s1814 = scalar_lea.sflag [#allocation3], 1
    %1815 = vsyncpa %s1814, 1

</llo_original>
